<compile_context>
chip_gen: v5e
topology: v5e:2x2
jax: 0.10.0
libtpu: 0.0.40
codegen_flags: <defaults>
</compile_context>

<pallas_src>
import numpy as np
import jax
import jax.numpy as jnp
from jax import lax
from jax.experimental import pallas as pl
from jax.experimental.pallas import tpu as pltpu


def _round_up(x, m):
    return ((x + m - 1) // m) * m


# ----------------------------------------------------------------------------
# Pallas kernel: forward for a block of TB batch elements (all dense matmuls,
# bf16 operands, f32 accumulation, everything lane-dense).
# ----------------------------------------------------------------------------
def wind_cnn_kernel(x_ref, w1_ref, b1_ref, w2_ref, b2_ref, w3_ref, b3_ref,
                    wfc_ref, bfc_ref, o_ref):
    # conv1 (1->20, 3x3) fused with the 2x2 maxpool, straight from raw pixels:
    #   x_ref is (TB, 128) bf16 (10x10 image flattened, lane-padded).
    #   w1_ref[q] is the (128, 384) folded weight for within-pool-window
    #   offset q; one matmul per offset yields all 16 windows x 20 channels
    #   (padded to 384).  Max over q == the 2x2 maxpool (bias add and ReLU
    #   commute with the max).
    x = x_ref[...]                                                 # bf16
    z = jnp.dot(x, w1_ref[0], preferred_element_type=jnp.float32)
    for q in range(1, 4):
        z = jnp.maximum(
            z, jnp.dot(x, w1_ref[q], preferred_element_type=jnp.float32))
    p1 = jnp.maximum(z + b1_ref[...], 0.0)                         # (TB, 384) f32

    # conv2 (20->50, 3x3 on the 4x4 pooled map): one dense matmul, the conv
    # receptive-field structure is baked (zero-padded) into w2_ref.
    h2 = jnp.maximum(
        jnp.dot(p1.astype(jnp.bfloat16), w2_ref[...],
                preferred_element_type=jnp.float32) + b2_ref[...], 0.0)  # (TB,256)

    # conv3 (50->200, 2x2, output 1x1) == a single (256, 256) padded matmul.
    h3 = jnp.maximum(
        jnp.dot(h2.astype(jnp.bfloat16), w3_ref[...],
                preferred_element_type=jnp.float32) + b3_ref[...], 0.0)  # (TB,256)

    # fc (200 -> 200), padded to 256 lanes so the output store is lane-dense.
    o_ref[...] = (jnp.dot(h3.astype(jnp.bfloat16), wfc_ref[...],
                          preferred_element_type=jnp.float32)
                  + bfc_ref[...])                                   # (TB, 256)


# ----------------------------------------------------------------------------
# Repack PyTorch-layout weights into the dense-matmul form used by the kernel.
# All matmul weights are stored bf16; biases stay f32.
# ----------------------------------------------------------------------------
def make_kernel_params(torch_params):
    w1, b1, w2, b2, w3, b3, wfc, bfc = [np.asarray(p, np.float32)
                                        for p in torch_params]

    # conv1 + maxpool folded over the *raw* 10x10 pixels.  For pool window
    # w = (pi, pj) and within-window offset q = 2*di2 + dj2, channel cout:
    #   z_q[w*20+cout] = sum_{ti,tj} x[2*pi+di2+ti, 2*pj+dj2+tj] * w1[cout,0,ti,tj]
    # so the folded weight is (pixel 100->128, 16*20=320 -> pad 384) per q.
    w1q = np.zeros((4, 128, 384), np.float32)
    for di2 in range(2):
        for dj2 in range(2):
            q = 2 * di2 + dj2
            for pi in range(4):
                for pj in range(4):
                    col = (4 * pi + pj) * 20
                    for ti in range(3):
                        for tj in range(3):
                            r = 10 * (2 * pi + di2 + ti) + (2 * pj + dj2 + tj)
                            w1q[q, r, col:col + 20] += w1[:, 0, ti, tj]
    b1big = np.zeros((1, 384), np.float32)
    b1big[0, :320] = np.tile(b1, 16)

    # conv2: (50,20,3,3) embedded in a dense (384, 256) matrix mapping the
    # flattened 4x4x20 pooled map (row = (4*ii+jj)*20 + cin) to the flattened
    # 2x2x50 conv2 output (col = (2*oi+oj)*50 + cout); padding is zero.
    w2big = np.zeros((384, 256), np.float32)
    for oi in range(2):
        for oj in range(2):
            for di in range(3):
                for dj in range(3):
                    r = (4 * (oi + di) + (oj + dj)) * 20
                    c = (2 * oi + oj) * 50
                    w2big[r:r + 20, c:c + 50] = w2[:, :, di, dj].T  # (cin,cout)
    b2big = np.zeros((1, 256), np.float32)
    b2big[0, :200] = np.tile(b2, 4)

    # conv3: (200,50,2,2) -> ((2*di+dj)*50 + cin, cout), zero-padded to 256x256.
    w3big = np.zeros((256, 256), np.float32)
    w3big[:200, :200] = np.transpose(w3, (2, 3, 1, 0)).reshape(200, 200)
    b3big = np.zeros((1, 256), np.float32)
    b3big[0, :200] = b3

    # fc: transposed and padded 200 -> 256 on both dims for dense stores.
    wfcp = np.zeros((256, 256), np.float32)
    wfcp[:200, :200] = wfc.T
    bfcp = np.zeros((1, 256), np.float32)
    bfcp[0, :200] = bfc

    return (jnp.asarray(w1q, jnp.bfloat16), jnp.asarray(b1big),
            jnp.asarray(w2big, jnp.bfloat16), jnp.asarray(b2big),
            jnp.asarray(w3big, jnp.bfloat16), jnp.asarray(b3big),
            jnp.asarray(wfcp, jnp.bfloat16), jnp.asarray(bfcp))


# ----------------------------------------------------------------------------
# Batch-block selection: big blocks to amortise per-step overhead (v5e/v6e);
# if the whole batch would fit in one step, split into two even steps so both
# v7x TensorCores get work (the grid axis is "parallel").
# ----------------------------------------------------------------------------
def _choose_tb(B, batch_block):
    tb = min(batch_block, _round_up(max(B, 8), 8))
    if _round_up(B, tb) // tb < 2 and B >= 16:
        tb = _round_up((B + 1) // 2, 8)
    return tb


# ----------------------------------------------------------------------------
# pallas_call wrapper: batch-blocked grid over the raw (lane-padded) pixels.
# ----------------------------------------------------------------------------
def wind_speed_cnn_pallas(x, kparams, *, batch_block=512):
    (w1q, b1big, w2big, b2big, w3big, b3big, wfcp, bfcp) = kparams
    B = x.shape[0]

    # Raw pixels straight into the kernel: (B,1,10,10) -> (B,100) bf16,
    # lane-padded to 128.  No im2col pass; patch selection lives in w1q.
    xf = x.reshape(B, 100).astype(jnp.bfloat16)

    tb = _choose_tb(B, batch_block)
    bp = _round_up(B, tb)
    xf = jnp.pad(xf, ((0, bp - B), (0, 128 - 100)))
    grid = (bp // tb,)

    grid_spec = pltpu.PrefetchScalarGridSpec(
        num_scalar_prefetch=0,
        grid=grid,
        in_specs=[
            pl.BlockSpec((tb, 128), lambda b: (b, 0)),         # raw pixels bf16
            pl.BlockSpec((4, 128, 384), lambda b: (0, 0, 0)),  # conv1+pool fold
            pl.BlockSpec((1, 384), lambda b: (0, 0)),          # b1 (tiled, pad)
            pl.BlockSpec((384, 256), lambda b: (0, 0)),        # conv2 dense
            pl.BlockSpec((1, 256), lambda b: (0, 0)),          # b2 (tiled, pad)
            pl.BlockSpec((256, 256), lambda b: (0, 0)),        # conv3 flat (pad)
            pl.BlockSpec((1, 256), lambda b: (0, 0)),          # b3 (pad)
            pl.BlockSpec((256, 256), lambda b: (0, 0)),        # fc W.T (pad)
            pl.BlockSpec((1, 256), lambda b: (0, 0)),          # fc bias (pad)
        ],
        out_specs=pl.BlockSpec((tb, 256), lambda b: (b, 0)),
    )
    out = pl.pallas_call(
        wind_cnn_kernel,
        out_shape=jax.ShapeDtypeStruct((bp, 256), jnp.float32),
        grid_spec=grid_spec,
        compiler_params=pltpu.CompilerParams(
            dimension_semantics=("parallel",),   # batch blocks independent
            vmem_limit_bytes=32 * 1024 * 1024,   # >> actual need (<8 MiB @ tb=512)
        ),
    )(xf, w1q, b1big, w2big, b2big, w3big, b3big, wfcp, bfcp)
    return out[:B, :200]


# ----------------------------------------------------------------------------
# Pure-JAX reference (mirrors the PyTorch module exactly, NCHW / OIHW, f32).
# ----------------------------------------------------------------------------
def reference_forward(x, tparams):
    w1, b1, w2, b2, w3, b3, wfc, bfc = tparams
    dn = ("NCHW", "OIHW", "NCHW")
    y = lax.conv_general_dilated(x, w1, (1, 1), "VALID", dimension_numbers=dn)
    y = jnp.maximum(y + b1[None, :, None, None], 0.0)
    y = lax.reduce_window(y, -jnp.inf, lax.max, (1, 1, 2, 2), (1, 1, 2, 2), "VALID")
    y = lax.conv_general_dilated(y, w2, (1, 1), "VALID", dimension_numbers=dn)
    y = jnp.maximum(y + b2[None, :, None, None], 0.0)
    y = lax.conv_general_dilated(y, w3, (1, 1), "VALID", dimension_numbers=dn)
    y = jnp.maximum(y + b3[None, :, None, None], 0.0)
    y = y.reshape(y.shape[0], 200)
    return y @ wfc.T + bfc


if __name__ == "__main__":
    key = jax.random.PRNGKey(0)
    ks = jax.random.split(key, 10)

    def init(k, shape, fan_in):
        return jax.random.normal(k, shape, jnp.float32) / np.sqrt(fan_in)

    # PyTorch-layout parameters (deterministic synthetic init).
    w1_t = init(ks[0], (20, 1, 3, 3), 9)
    b1_t = init(ks[1], (20,), 9)
    w2_t = init(ks[2], (50, 20, 3, 3), 180)
    b2_t = init(ks[3], (50,), 180)
    w3_t = init(ks[4], (200, 50, 2, 2), 200)
    b3_t = init(ks[5], (200,), 200)
    wfc_t = init(ks[6], (200, 200), 200)
    bfc_t = init(ks[7], (200,), 200)
    torch_params = (w1_t, b1_t, w2_t, b2_t, w3_t, b3_t, wfc_t, bfc_t)
    kernel_params = make_kernel_params(torch_params)

    # bf16 matmul operands (f32 accumulate) vs an all-f32 reference: a
    # slightly looser tolerance than pure-f32 is appropriate.
    ATOL = RTOL = 3e-2

    # Small required case: (B=2, 1, 10, 10) -> conv1 8x8 -> pool 4x4 -> 2x2 -> 1x1.
    x_small = jax.random.normal(ks[8], (2, 1, 10, 10), jnp.float32)
    out_small = jax.block_until_ready(wind_speed_cnn_pallas(x_small, kernel_params))
    ref_small = jax.block_until_ready(reference_forward(x_small, torch_params))
    if not np.allclose(np.asarray(out_small), np.asarray(ref_small),
                       atol=ATOL, rtol=RTOL):
        raise AssertionError("Pallas kernel output does not match reference (B=2)")

    # Larger batch: exercises the multi-step "parallel" grid + batch padding.
    x_big = jax.random.normal(ks[9], (200, 1, 10, 10), jnp.float32)
    out_big = jax.block_until_ready(wind_speed_cnn_pallas(x_big, kernel_params))
    ref_big = jax.block_until_ready(reference_forward(x_big, torch_params))
    if not np.allclose(np.asarray(out_big), np.asarray(ref_big),
                       atol=ATOL, rtol=RTOL):
        raise AssertionError("Pallas kernel output does not match reference (B=200)")

    print("KERNEL_OK")
</pallas_src>

<mosaic_0001>
module attributes {stable_mosaic.version = 11 : i64} {
  func.func @wind_cnn_kernel(%arg0: i32, %arg1: memref<8x128xbf16, #tpu.memory_space<vmem>>, %arg2: memref<4x128x384xbf16, #tpu.memory_space<vmem>>, %arg3: memref<1x384xf32, #tpu.memory_space<vmem>>, %arg4: memref<384x256xbf16, #tpu.memory_space<vmem>>, %arg5: memref<1x256xf32, #tpu.memory_space<vmem>>, %arg6: memref<256x256xbf16, #tpu.memory_space<vmem>>, %arg7: memref<1x256xf32, #tpu.memory_space<vmem>>, %arg8: memref<256x256xbf16, #tpu.memory_space<vmem>>, %arg9: memref<1x256xf32, #tpu.memory_space<vmem>>, %arg10: memref<8x256xf32, #tpu.memory_space<vmem>>) attributes {dimension_semantics = [#tpu.dimension_semantics<parallel>], iteration_bounds = array<i64: 1>, scalar_prefetch = 0 : i64, scratch_operands = 0 : i64, tpu.core_type = #tpu.core_type<tc>, window_params = [{transform_indices = @transform_0, window_bounds = array<i64: 8, 128>}, {pipeline_mode = #tpu.pipeline_mode<synchronous>, transform_indices = @transform_1, window_bounds = array<i64: 4, 128, 384>}, {pipeline_mode = #tpu.pipeline_mode<synchronous>, transform_indices = @transform_2, window_bounds = array<i64: 1, 384>}, {pipeline_mode = #tpu.pipeline_mode<synchronous>, transform_indices = @transform_3, window_bounds = array<i64: 384, 256>}, {pipeline_mode = #tpu.pipeline_mode<synchronous>, transform_indices = @transform_4, window_bounds = array<i64: 1, 256>}, {pipeline_mode = #tpu.pipeline_mode<synchronous>, transform_indices = @transform_5, window_bounds = array<i64: 256, 256>}, {pipeline_mode = #tpu.pipeline_mode<synchronous>, transform_indices = @transform_6, window_bounds = array<i64: 1, 256>}, {pipeline_mode = #tpu.pipeline_mode<synchronous>, transform_indices = @transform_7, window_bounds = array<i64: 256, 256>}, {pipeline_mode = #tpu.pipeline_mode<synchronous>, transform_indices = @transform_8, window_bounds = array<i64: 1, 256>}, {transform_indices = @transform_9, window_bounds = array<i64: 8, 256>}]} {
    %c0 = arith.constant 0 : index
    %c0_0 = arith.constant 0 : index
    %0 = vector.load %arg1[%c0, %c0_0] : memref<8x128xbf16, #tpu.memory_space<vmem>>, vector<8x128xbf16>
    %c0_1 = arith.constant 0 : index
    %c0_2 = arith.constant 0 : index
    %c0_3 = arith.constant 0 : index
    %1 = vector.load %arg2[%c0_1, %c0_2, %c0_3] : memref<4x128x384xbf16, #tpu.memory_space<vmem>>, vector<1x128x384xbf16>
    %2 = vector.shape_cast %1 : vector<1x128x384xbf16> to vector<128x384xbf16>
    %cst = arith.constant dense<0.000000e+00> : vector<8x384xf32>
    %3 = tpu.matmul %0, %2, %cst {dimension_numbers = #tpu.dot_dimension_numbers<[1], [0], [0], [1], [0, 0, 1, 1], [], []>} : vector<8x128xbf16>, vector<128x384xbf16>, vector<8x384xf32> -> vector<8x384xf32>
    %c1 = arith.constant 1 : index
    %c0_4 = arith.constant 0 : index
    %c0_5 = arith.constant 0 : index
    %4 = vector.load %arg2[%c1, %c0_4, %c0_5] : memref<4x128x384xbf16, #tpu.memory_space<vmem>>, vector<1x128x384xbf16>
    %5 = vector.shape_cast %4 : vector<1x128x384xbf16> to vector<128x384xbf16>
    %cst_6 = arith.constant dense<0.000000e+00> : vector<8x384xf32>
    %6 = tpu.matmul %0, %5, %cst_6 {dimension_numbers = #tpu.dot_dimension_numbers<[1], [0], [0], [1], [0, 0, 1, 1], [], []>} : vector<8x128xbf16>, vector<128x384xbf16>, vector<8x384xf32> -> vector<8x384xf32>
    %7 = arith.maximumf %3, %6 : vector<8x384xf32>
    %c2 = arith.constant 2 : index
    %c0_7 = arith.constant 0 : index
    %c0_8 = arith.constant 0 : index
    %8 = vector.load %arg2[%c2, %c0_7, %c0_8] : memref<4x128x384xbf16, #tpu.memory_space<vmem>>, vector<1x128x384xbf16>
    %9 = vector.shape_cast %8 : vector<1x128x384xbf16> to vector<128x384xbf16>
    %cst_9 = arith.constant dense<0.000000e+00> : vector<8x384xf32>
    %10 = tpu.matmul %0, %9, %cst_9 {dimension_numbers = #tpu.dot_dimension_numbers<[1], [0], [0], [1], [0, 0, 1, 1], [], []>} : vector<8x128xbf16>, vector<128x384xbf16>, vector<8x384xf32> -> vector<8x384xf32>
    %11 = arith.maximumf %7, %10 : vector<8x384xf32>
    %c3 = arith.constant 3 : index
    %c0_10 = arith.constant 0 : index
    %c0_11 = arith.constant 0 : index
    %12 = vector.load %arg2[%c3, %c0_10, %c0_11] : memref<4x128x384xbf16, #tpu.memory_space<vmem>>, vector<1x128x384xbf16>
    %13 = vector.shape_cast %12 : vector<1x128x384xbf16> to vector<128x384xbf16>
    %cst_12 = arith.constant dense<0.000000e+00> : vector<8x384xf32>
    %14 = tpu.matmul %0, %13, %cst_12 {dimension_numbers = #tpu.dot_dimension_numbers<[1], [0], [0], [1], [0, 0, 1, 1], [], []>} : vector<8x128xbf16>, vector<128x384xbf16>, vector<8x384xf32> -> vector<8x384xf32>
    %15 = arith.maximumf %11, %14 : vector<8x384xf32>
    %c0_13 = arith.constant 0 : index
    %c0_14 = arith.constant 0 : index
    %16 = vector.load %arg3[%c0_13, %c0_14] : memref<1x384xf32, #tpu.memory_space<vmem>>, vector<1x384xf32>
    %17 = vector.broadcast %16 : vector<1x384xf32> to vector<8x384xf32>
    %18 = arith.addf %15, %17 : vector<8x384xf32>
    %cst_15 = arith.constant 0.000000e+00 : f32
    %19 = vector.broadcast %cst_15 : f32 to vector<8x384xf32>
    %20 = arith.maximumf %18, %19 : vector<8x384xf32>
    %21 = arith.truncf %20 : vector<8x384xf32> to vector<8x384xbf16>
    %c0_16 = arith.constant 0 : index
    %c0_17 = arith.constant 0 : index
    %22 = vector.load %arg4[%c0_16, %c0_17] : memref<384x256xbf16, #tpu.memory_space<vmem>>, vector<384x256xbf16>
    %cst_18 = arith.constant dense<0.000000e+00> : vector<8x256xf32>
    %23 = tpu.matmul %21, %22, %cst_18 {dimension_numbers = #tpu.dot_dimension_numbers<[1], [0], [0], [1], [0, 0, 1, 1], [], []>} : vector<8x384xbf16>, vector<384x256xbf16>, vector<8x256xf32> -> vector<8x256xf32>
    %c0_19 = arith.constant 0 : index
    %c0_20 = arith.constant 0 : index
    %24 = vector.load %arg5[%c0_19, %c0_20] : memref<1x256xf32, #tpu.memory_space<vmem>>, vector<1x256xf32>
    %25 = vector.broadcast %24 : vector<1x256xf32> to vector<8x256xf32>
    %26 = arith.addf %23, %25 : vector<8x256xf32>
    %cst_21 = arith.constant 0.000000e+00 : f32
    %27 = vector.broadcast %cst_21 : f32 to vector<8x256xf32>
    %28 = arith.maximumf %26, %27 : vector<8x256xf32>
    %29 = arith.truncf %28 : vector<8x256xf32> to vector<8x256xbf16>
    %c0_22 = arith.constant 0 : index
    %c0_23 = arith.constant 0 : index
    %30 = vector.load %arg6[%c0_22, %c0_23] : memref<256x256xbf16, #tpu.memory_space<vmem>>, vector<256x256xbf16>
    %cst_24 = arith.constant dense<0.000000e+00> : vector<8x256xf32>
    %31 = tpu.matmul %29, %30, %cst_24 {dimension_numbers = #tpu.dot_dimension_numbers<[1], [0], [0], [1], [0, 0, 1, 1], [], []>} : vector<8x256xbf16>, vector<256x256xbf16>, vector<8x256xf32> -> vector<8x256xf32>
    %c0_25 = arith.constant 0 : index
    %c0_26 = arith.constant 0 : index
    %32 = vector.load %arg7[%c0_25, %c0_26] : memref<1x256xf32, #tpu.memory_space<vmem>>, vector<1x256xf32>
    %33 = vector.broadcast %32 : vector<1x256xf32> to vector<8x256xf32>
    %34 = arith.addf %31, %33 : vector<8x256xf32>
    %cst_27 = arith.constant 0.000000e+00 : f32
    %35 = vector.broadcast %cst_27 : f32 to vector<8x256xf32>
    %36 = arith.maximumf %34, %35 : vector<8x256xf32>
    %37 = arith.truncf %36 : vector<8x256xf32> to vector<8x256xbf16>
    %c0_28 = arith.constant 0 : index
    %c0_29 = arith.constant 0 : index
    %38 = vector.load %arg8[%c0_28, %c0_29] : memref<256x256xbf16, #tpu.memory_space<vmem>>, vector<256x256xbf16>
    %cst_30 = arith.constant dense<0.000000e+00> : vector<8x256xf32>
    %39 = tpu.matmul %37, %38, %cst_30 {dimension_numbers = #tpu.dot_dimension_numbers<[1], [0], [0], [1], [0, 0, 1, 1], [], []>} : vector<8x256xbf16>, vector<256x256xbf16>, vector<8x256xf32> -> vector<8x256xf32>
    %c0_31 = arith.constant 0 : index
    %c0_32 = arith.constant 0 : index
    %40 = vector.load %arg9[%c0_31, %c0_32] : memref<1x256xf32, #tpu.memory_space<vmem>>, vector<1x256xf32>
    %41 = vector.broadcast %40 : vector<1x256xf32> to vector<8x256xf32>
    %42 = arith.addf %39, %41 : vector<8x256xf32>
    %c0_33 = arith.constant 0 : index
    %c0_34 = arith.constant 0 : index
    %43 = vector.load %arg10[%c0_33, %c0_34] : memref<8x256xf32, #tpu.memory_space<vmem>>, vector<8x256xf32>
    tpu.vector_store %arg10[%c0_33, %c0_34], %42 {strides = array<i32>} : memref<8x256xf32, #tpu.memory_space<vmem>>, vector<8x256xf32>,
    return
  }
  func.func @transform_0(%arg0: i32) -> (i32, i32) {
    %c0_i32 = arith.constant 0 : i32
    %c0_i32_0 = arith.constant 0 : i32
    return %arg0, %c0_i32 : i32, i32
  }
  func.func @transform_1(%arg0: i32) -> (i32, i32, i32) {
    %c0_i32 = arith.constant 0 : i32
    %c0_i32_0 = arith.constant 0 : i32
    %c0_i32_1 = arith.constant 0 : i32
    %c0_i32_2 = arith.constant 0 : i32
    return %c0_i32, %c0_i32_0, %c0_i32_1 : i32, i32, i32
  }
  func.func @transform_2(%arg0: i32) -> (i32, i32) {
    %c0_i32 = arith.constant 0 : i32
    %c0_i32_0 = arith.constant 0 : i32
    %c0_i32_1 = arith.constant 0 : i32
    return %c0_i32, %c0_i32_0 : i32, i32
  }
  func.func @transform_3(%arg0: i32) -> (i32, i32) {
    %c0_i32 = arith.constant 0 : i32
    %c0_i32_0 = arith.constant 0 : i32
    %c0_i32_1 = arith.constant 0 : i32
    return %c0_i32, %c0_i32_0 : i32, i32
  }
  func.func @transform_4(%arg0: i32) -> (i32, i32) {
    %c0_i32 = arith.constant 0 : i32
    %c0_i32_0 = arith.constant 0 : i32
    %c0_i32_1 = arith.constant 0 : i32
    return %c0_i32, %c0_i32_0 : i32, i32
  }
  func.func @transform_5(%arg0: i32) -> (i32, i32) {
    %c0_i32 = arith.constant 0 : i32
    %c0_i32_0 = arith.constant 0 : i32
    %c0_i32_1 = arith.constant 0 : i32
    return %c0_i32, %c0_i32_0 : i32, i32
  }
  func.func @transform_6(%arg0: i32) -> (i32, i32) {
    %c0_i32 = arith.constant 0 : i32
    %c0_i32_0 = arith.constant 0 : i32
    %c0_i32_1 = arith.constant 0 : i32
    return %c0_i32, %c0_i32_0 : i32, i32
  }
  func.func @transform_7(%arg0: i32) -> (i32, i32) {
    %c0_i32 = arith.constant 0 : i32
    %c0_i32_0 = arith.constant 0 : i32
    %c0_i32_1 = arith.constant 0 : i32
    return %c0_i32, %c0_i32_0 : i32, i32
  }
  func.func @transform_8(%arg0: i32) -> (i32, i32) {
    %c0_i32 = arith.constant 0 : i32
    %c0_i32_0 = arith.constant 0 : i32
    %c0_i32_1 = arith.constant 0 : i32
    return %c0_i32, %c0_i32_0 : i32, i32
  }
  func.func @transform_9(%arg0: i32) -> (i32, i32) {
    %c0_i32 = arith.constant 0 : i32
    %c0_i32_0 = arith.constant 0 : i32
    return %arg0, %c0_i32 : i32, i32
  }
}

</mosaic_0001>

<llo_original>
// kernel: tpu_custom_call.1
$region0: #{tpu_custom_call.1}
  #allocation0 [shape = 'u32[]', space=smem, size = 0x4, offset = 0x4, fixed_abs, tag = 'smem constant byte address 0x4 - core index']
  #allocation1 [shape = 'u32[72,128]{1,0:T(1,128)}', space=vmem, size = 0x9000, scoped, tag = 'internal scratch']
  %s0 = inlined_call_operand.hbm [shape: bf16[8,128], index: 0, kind: input, shape index: {}]
  %s1 = inlined_call_operand.hbm [shape: bf16[4,128,384], index: 1, kind: input, shape index: {}]
  %s2 = inlined_call_operand.hbm [shape: f32[1,384], index: 2, kind: input, shape index: {}]
  %s3 = inlined_call_operand.hbm [shape: bf16[384,256], index: 3, kind: input, shape index: {}]
  %s4 = inlined_call_operand.vmem [shape: f32[1,256], index: 4, kind: input, shape index: {}]
  %s5 = inlined_call_operand.hbm [shape: bf16[256,256], index: 5, kind: input, shape index: {}]
  %s6 = inlined_call_operand.vmem [shape: f32[1,256], index: 6, kind: input, shape index: {}]
  %s7 = inlined_call_operand.hbm [shape: bf16[256,256], index: 7, kind: input, shape index: {}]
  %s8 = inlined_call_operand.vmem [shape: f32[1,256], index: 8, kind: input, shape index: {}]
  %s9 = inlined_call_operand.hbm [shape: f32[8,256], index: 9, kind: output, shape index: {}]
  %s10 = sld [smem:[#allocation0]]
  $region70: #{tpu_custom_call.1} parent=0
    _
  %s12 = ssub.s32 1, %s10
  %s13 = scalar_select 0, %s12, %s10
  $region1: #{tpu_custom_call.1} parent=0
    #allocation2 [shape = 'u8[2048]{0}', space=vmem, size = 0x800, scoped, tag = 'input window, operand 0, single buffered']
    #allocation3 [shape = 's32[1]{0}', space=sflag, size = 0x4, scoped, tag = 'scoped memory for tpu_custom_call.1']
    #allocation4 [shape = 's32[1]{0}', space=sflag, size = 0x4, scoped, tag = 'scoped memory for tpu_custom_call.1']
    #allocation5 [shape = 'u8[393216]{0}', space=vmem, size = 0x60000, scoped, tag = 'input window, operand 1, single buffered']
    #allocation6 [shape = 's32[1]{0}', space=sflag, size = 0x4, scoped, tag = 'scoped memory for tpu_custom_call.1']
    #allocation7 [shape = 'u8[1536]{0}', space=vmem, size = 0x800, scoped, tag = 'input window, operand 2, single buffered']
    #allocation8 [shape = 'u8[196608]{0}', space=vmem, size = 0x30000, scoped, tag = 'input window, operand 3, single buffered']
    #allocation9 [shape = 's32[1]{0}', space=sflag, size = 0x4, scoped, tag = 'scoped memory for tpu_custom_call.1']
    #allocation10 [shape = 'u8[131072]{0}', space=vmem, size = 0x20000, scoped, tag = 'input window, operand 5, single buffered']
    #allocation11 [shape = 'u8[131072]{0}', space=vmem, size = 0x20000, scoped, tag = 'input window, operand 7, single buffered']
    #allocation12 [shape = 's32[1]{0}', space=sflag, size = 0x4, scoped, tag = 'scoped memory for tpu_custom_call.1']
    #allocation13 [shape = 'u8[8192]{0}', space=vmem, size = 0x2000, scoped, tag = 'output window, operand 0, single buffered']
    %14 = vsyncpa [#allocation3], 0
    %15 = vsyncpa [#allocation6], 0
    %16 = vsyncpa [#allocation9], 0
    %17 = vsyncpa [#allocation12], 0
    %18 = vsyncpa [#allocation4], 0
    // Predicated region
    $region2: #{tpu_custom_call.1} parent=1 // pred_check
      _
    $region3: #{tpu_custom_call.1} parent=1 // pred_check_branch
      %20 = sbr.rel (0) target = $region5
    $region4: #{tpu_custom_call.1} parent=1 // pred_region
      %22 = vsyncadd [#allocation3], 0
      %s24 = sshll.u32 %s0, 4
      %s25 = int_to_ptr.hbm [resolvable:$true] %s24
      %s26 = sshll.u32 [#allocation2], 4
      %s27 = int_to_ptr.vmem [resolvable:$true] %s26
      %29 = dma.hbm_to_vmem [thread:$0]  %s25, 64, %s27, [#allocation3]
    $region5: #{tpu_custom_call.1} parent=1 // pred_fallthru
      _
    // Predicated region
    $region6: #{tpu_custom_call.1} parent=1 // pred_check
      _
    $region7: #{tpu_custom_call.1} parent=1 // pred_check_branch
      %31 = sbr.rel (0) target = $region9
    $region8: #{tpu_custom_call.1} parent=1 // pred_region
      %33 = vsyncadd [#allocation6], 0
      %s34 = sshll.u32 %s1, 4
      %s35 = int_to_ptr.hbm [resolvable:$true] %s34
      %s36 = sshll.u32 [#allocation5], 4
      %s37 = int_to_ptr.vmem [resolvable:$true] %s36
      %42 = dma.hbm_to_vmem [thread:$0]  %s35, 12288, %s37, [#allocation6], 192, 192, 12
    $region9: #{tpu_custom_call.1} parent=1 // pred_fallthru
      _
    // Predicated region
    $region10: #{tpu_custom_call.1} parent=1 // pred_check
      _
    $region11: #{tpu_custom_call.1} parent=1 // pred_check_branch
      %44 = sbr.rel (0) target = $region13
    $region12: #{tpu_custom_call.1} parent=1 // pred_region
      %46 = vsyncadd [#allocation6], 0
      %s48 = sshll.u32 %s2, 4
      %s49 = int_to_ptr.hbm [resolvable:$true] %s48
      %s50 = sshll.u32 [#allocation7], 4
      %s51 = int_to_ptr.vmem [resolvable:$true] %s50
      %53 = dma.hbm_to_vmem [thread:$0]  %s49, 48, %s51, [#allocation6]
    $region13: #{tpu_custom_call.1} parent=1 // pred_fallthru
      _
    // Predicated region
    $region14: #{tpu_custom_call.1} parent=1 // pred_check
      _
    $region15: #{tpu_custom_call.1} parent=1 // pred_check_branch
      %55 = sbr.rel (0) target = $region17
    $region16: #{tpu_custom_call.1} parent=1 // pred_region
      %57 = vsyncadd [#allocation9], 0
      %s58 = sshll.u32 %s3, 4
      %s59 = int_to_ptr.hbm [resolvable:$true] %s58
      %s60 = sshll.u32 [#allocation8], 4
      %s61 = int_to_ptr.vmem [resolvable:$true] %s60
      %66 = dma.hbm_to_vmem [thread:$0]  %s59, 6144, %s61, [#allocation9], 128, 128, 8
    $region17: #{tpu_custom_call.1} parent=1 // pred_fallthru
      _
    // Predicated region
    $region18: #{tpu_custom_call.1} parent=1 // pred_check
      _
    $region19: #{tpu_custom_call.1} parent=1 // pred_check_branch
      %68 = sbr.rel (0) target = $region21
    $region20: #{tpu_custom_call.1} parent=1 // pred_region
      _
    $region21: #{tpu_custom_call.1} parent=1 // pred_fallthru
      _
    // Predicated region
    $region22: #{tpu_custom_call.1} parent=1 // pred_check
      _
    $region23: #{tpu_custom_call.1} parent=1 // pred_check_branch
      %70 = sbr.rel (0) target = $region25
    $region24: #{tpu_custom_call.1} parent=1 // pred_region
      %72 = vsyncadd [#allocation9], 0
      %s73 = sshll.u32 %s5, 4
      %s74 = int_to_ptr.hbm [resolvable:$true] %s73
      %s75 = sshll.u32 [#allocation10], 4
      %s76 = int_to_ptr.vmem [resolvable:$true] %s75
      %81 = dma.hbm_to_vmem [thread:$0]  %s74, 4096, %s76, [#allocation9], 128, 128, 8
    $region25: #{tpu_custom_call.1} parent=1 // pred_fallthru
      _
    // Predicated region
    $region26: #{tpu_custom_call.1} parent=1 // pred_check
      _
    $region27: #{tpu_custom_call.1} parent=1 // pred_check_branch
      %83 = sbr.rel (0) target = $region29
    $region28: #{tpu_custom_call.1} parent=1 // pred_region
      _
    $region29: #{tpu_custom_call.1} parent=1 // pred_fallthru
      _
    // Predicated region
    $region30: #{tpu_custom_call.1} parent=1 // pred_check
      _
    $region31: #{tpu_custom_call.1} parent=1 // pred_check_branch
      %85 = sbr.rel (0) target = $region33
    $region32: #{tpu_custom_call.1} parent=1 // pred_region
      %87 = vsyncadd [#allocation12], 0
      %s88 = sshll.u32 %s7, 4
      %s89 = int_to_ptr.hbm [resolvable:$true] %s88
      %s90 = sshll.u32 [#allocation11], 4
      %s91 = int_to_ptr.vmem [resolvable:$true] %s90
      %96 = dma.hbm_to_vmem [thread:$0]  %s89, 4096, %s91, [#allocation12], 128, 128, 8
    $region33: #{tpu_custom_call.1} parent=1 // pred_fallthru
      _
    // Predicated region
    $region34: #{tpu_custom_call.1} parent=1 // pred_check
      _
    $region35: #{tpu_custom_call.1} parent=1 // pred_check_branch
      %98 = sbr.rel (0) target = $region37
    $region36: #{tpu_custom_call.1} parent=1 // pred_region
      _
    $region37: #{tpu_custom_call.1} parent=1 // pred_fallthru
      _
    // Predicated region
    $region38: #{tpu_custom_call.1} parent=1 // pred_check
      _
    $region39: #{tpu_custom_call.1} parent=1 // pred_check_branch
      %100 = sbr.rel (0) target = $region41
    $region40: #{tpu_custom_call.1} parent=1 // pred_region
      %102 = dma.done [#allocation3], 64
    $region41: #{tpu_custom_call.1} parent=1 // pred_fallthru
      _
    // Predicated region
    $region42: #{tpu_custom_call.1} parent=1 // pred_check
      _
    $region43: #{tpu_custom_call.1} parent=1 // pred_check_branch
      %104 = sbr.rel (0) target = $region45
    $region44: #{tpu_custom_call.1} parent=1 // pred_region
      %106 = dma.done [#allocation6], 12288
    $region45: #{tpu_custom_call.1} parent=1 // pred_fallthru
      _
    // Predicated region
    $region46: #{tpu_custom_call.1} parent=1 // pred_check
      _
    $region47: #{tpu_custom_call.1} parent=1 // pred_check_branch
      %108 = sbr.rel (0) target = $region49
    $region48: #{tpu_custom_call.1} parent=1 // pred_region
      %110 = dma.done [#allocation6], 48
    $region49: #{tpu_custom_call.1} parent=1 // pred_fallthru
      _
    // Predicated region
    $region50: #{tpu_custom_call.1} parent=1 // pred_check
      _
    $region51: #{tpu_custom_call.1} parent=1 // pred_check_branch
      %112 = sbr.rel (0) target = $region53
    $region52: #{tpu_custom_call.1} parent=1 // pred_region
      %114 = dma.done [#allocation9], 6144
    $region53: #{tpu_custom_call.1} parent=1 // pred_fallthru
      _
    // Predicated region
    $region54: #{tpu_custom_call.1} parent=1 // pred_check
      _
    $region55: #{tpu_custom_call.1} parent=1 // pred_check_branch
      %116 = sbr.rel (0) target = $region57
    $region56: #{tpu_custom_call.1} parent=1 // pred_region
      %118 = dma.done [#allocation9], 4096
    $region57: #{tpu_custom_call.1} parent=1 // pred_fallthru
      _
    // Predicated region
    $region58: #{tpu_custom_call.1} parent=1 // pred_check
      _
    $region59: #{tpu_custom_call.1} parent=1 // pred_check_branch
      %120 = sbr.rel (0) target = $region61
    $region60: #{tpu_custom_call.1} parent=1 // pred_region
      %122 = dma.done [#allocation12], 4096
    $region61: #{tpu_custom_call.1} parent=1 // pred_fallthru
      _
    %v123 = vld [vmem:[#allocation2] sm:$0xf]
    %v124 = vld [vmem:[#allocation5] sm:$0xff]
    %v125 = vld [vmem:[#allocation5 + $0x8] sm:$0xf]
    %v126 = vld [vmem:[#allocation5 + $0xc] sm:$0xff]
    %v127 = vld [vmem:[#allocation5 + $0x14] sm:$0xf]
    %v128 = vld [vmem:[#allocation5 + $0x18] sm:$0xff]
    %v129 = vld [vmem:[#allocation5 + $0x20] sm:$0xf]
    %v130 = vld [vmem:[#allocation5 + $0x24] sm:$0xff]
    %v131 = vld [vmem:[#allocation5 + $0x2c] sm:$0xf]
    %v132 = vld [vmem:[#allocation5 + $0x30] sm:$0xff]
    %v133 = vld [vmem:[#allocation5 + $0x38] sm:$0xf]
    %v134 = vld [vmem:[#allocation5 + $0x3c] sm:$0xff]
    %v135 = vld [vmem:[#allocation5 + $0x44] sm:$0xf]
    %v136 = vld [vmem:[#allocation5 + $0x48] sm:$0xff]
    %v137 = vld [vmem:[#allocation5 + $0x50] sm:$0xf]
    %v138 = vld [vmem:[#allocation5 + $0x54] sm:$0xff]
    %v139 = vld [vmem:[#allocation5 + $0x5c] sm:$0xf]
    %v140 = vld [vmem:[#allocation5 + $0x60] sm:$0xff]
    %v141 = vld [vmem:[#allocation5 + $0x68] sm:$0xf]
    %v142 = vld [vmem:[#allocation5 + $0x6c] sm:$0xff]
    %v143 = vld [vmem:[#allocation5 + $0x74] sm:$0xf]
    %v144 = vld [vmem:[#allocation5 + $0x78] sm:$0xff]
    %v145 = vld [vmem:[#allocation5 + $0x80] sm:$0xf]
    %v146 = vld [vmem:[#allocation5 + $0x84] sm:$0xff]
    %v147 = vld [vmem:[#allocation5 + $0x8c] sm:$0xf]
    %v148 = vld [vmem:[#allocation5 + $0x90] sm:$0xff]
    %v149 = vld [vmem:[#allocation5 + $0x98] sm:$0xf]
    %v150 = vld [vmem:[#allocation5 + $0x9c] sm:$0xff]
    %v151 = vld [vmem:[#allocation5 + $0xa4] sm:$0xf]
    %v152 = vld [vmem:[#allocation5 + $0xa8] sm:$0xff]
    %v153 = vld [vmem:[#allocation5 + $0xb0] sm:$0xf]
    %v154 = vld [vmem:[#allocation5 + $0xb4] sm:$0xff]
    %v155 = vld [vmem:[#allocation5 + $0xbc] sm:$0xf]
    %v188 = vunpack.c.l.b16 %v124
    %v189 = vunpack.c.h.b16 %v124
    %v190 = vunpack.c.l.b16 %v125
    %v191 = vunpack.c.l.b16 %v126
    %v192 = vunpack.c.h.b16 %v126
    %v193 = vunpack.c.l.b16 %v127
    %v194 = vunpack.c.l.b16 %v128
    %v195 = vunpack.c.h.b16 %v128
    %v196 = vunpack.c.l.b16 %v129
    %v197 = vunpack.c.l.b16 %v130
    %v198 = vunpack.c.h.b16 %v130
    %v199 = vunpack.c.l.b16 %v131
    %v200 = vunpack.c.l.b16 %v132
    %v201 = vunpack.c.h.b16 %v132
    %v202 = vunpack.c.l.b16 %v133
    %v203 = vunpack.c.l.b16 %v134
    %v204 = vunpack.c.h.b16 %v134
    %v205 = vunpack.c.l.b16 %v135
    %v206 = vunpack.c.l.b16 %v136
    %v207 = vunpack.c.h.b16 %v136
    %v208 = vunpack.c.l.b16 %v137
    %v209 = vunpack.c.l.b16 %v138
    %v210 = vunpack.c.h.b16 %v138
    %v211 = vunpack.c.l.b16 %v139
    %v212 = vunpack.c.l.b16 %v140
    %v213 = vunpack.c.h.b16 %v140
    %v214 = vunpack.c.l.b16 %v141
    %v215 = vunpack.c.l.b16 %v142
    %v216 = vunpack.c.h.b16 %v142
    %v217 = vunpack.c.l.b16 %v143
    %v218 = vunpack.c.l.b16 %v144
    %v219 = vunpack.c.h.b16 %v144
    %v220 = vunpack.c.l.b16 %v145
    %v221 = vunpack.c.l.b16 %v146
    %v222 = vunpack.c.h.b16 %v146
    %v223 = vunpack.c.l.b16 %v147
    %v224 = vunpack.c.l.b16 %v148
    %v225 = vunpack.c.h.b16 %v148
    %v226 = vunpack.c.l.b16 %v149
    %v227 = vunpack.c.l.b16 %v150
    %v228 = vunpack.c.h.b16 %v150
    %v229 = vunpack.c.l.b16 %v151
    %v230 = vunpack.c.l.b16 %v152
    %v231 = vunpack.c.h.b16 %v152
    %v232 = vunpack.c.l.b16 %v153
    %v233 = vunpack.c.l.b16 %v154
    %v234 = vunpack.c.h.b16 %v154
    %v235 = vunpack.c.l.b16 %v155
    %v236 = vpack.c.b16 %v191, %v188
    %v237 = vpack.c.b16 %v192, %v189
    %v238 = vpack.c.b16 %v193, %v190
    %v239 = vpack.c.b16 %v197, %v194
    %v240 = vpack.c.b16 %v198, %v195
    %v241 = vpack.c.b16 %v199, %v196
    %v242 = vpack.c.b16 %v203, %v200
    %v243 = vpack.c.b16 %v204, %v201
    %v244 = vpack.c.b16 %v205, %v202
    %v245 = vpack.c.b16 %v209, %v206
    %v246 = vpack.c.b16 %v210, %v207
    %v247 = vpack.c.b16 %v211, %v208
    %v248 = vpack.c.b16 %v215, %v212
    %v249 = vpack.c.b16 %v216, %v213
    %v250 = vpack.c.b16 %v217, %v214
    %v251 = vpack.c.b16 %v221, %v218
    %v252 = vpack.c.b16 %v222, %v219
    %v253 = vpack.c.b16 %v223, %v220
    %v254 = vpack.c.b16 %v227, %v224
    %v255 = vpack.c.b16 %v228, %v225
    %v256 = vpack.c.b16 %v229, %v226
    %v257 = vpack.c.b16 %v233, %v230
    %v258 = vpack.c.b16 %v234, %v231
    %v259 = vpack.c.b16 %v235, %v232
    %284 = vmatpush.bf16.msra.mxu0 %v257
    %285 = vmatpush.bf16.msra.mxu0 %v254
    %286 = vmatpush.bf16.msra.mxu0 %v251
    %287 = vmatpush.bf16.msra.mxu0 %v248
    %288 = vmatpush.bf16.msra.mxu0 %v245
    %289 = vmatpush.bf16.msra.mxu0 %v242
    %290 = vmatpush.bf16.msra.mxu0 %v239
    %291 = vmatpush.bf16.msra.mxu0 %v236
    %292 = vmatmul.bf16.gmra.mxu0 %v123
    %v293 = vpop.f32.mrf.mxu0
    %v294 = vadd.f32 0.0, %v293
    %v295 = vpop.f32.mrf.mxu0
    %296 = vdwg.mxu0
    %297 = vmatpush.bf16.msra.mxu0 %v258
    %298 = vmatpush.bf16.msra.mxu0 %v255
    %299 = vmatpush.bf16.msra.mxu0 %v252
    %300 = vmatpush.bf16.msra.mxu0 %v249
    %301 = vmatpush.bf16.msra.mxu0 %v246
    %302 = vmatpush.bf16.msra.mxu0 %v243
    %303 = vmatpush.bf16.msra.mxu0 %v240
    %304 = vmatpush.bf16.msra.mxu0 %v237
    %305 = vmatmul.bf16.gmra.mxu0 %v123
    %v306 = vpop.f32.mrf.mxu0
    %v307 = vadd.f32 0.0, %v306
    %v308 = vpop.f32.mrf.mxu0
    %309 = vdwg.mxu0
    %310 = vmatpush.bf16.msra.mxu0 %v259
    %311 = vmatpush.bf16.msra.mxu0 %v256
    %312 = vmatpush.bf16.msra.mxu0 %v253
    %313 = vmatpush.bf16.msra.mxu0 %v250
    %314 = vmatpush.bf16.msra.mxu0 %v247
    %315 = vmatpush.bf16.msra.mxu0 %v244
    %316 = vmatpush.bf16.msra.mxu0 %v241
    %317 = vmatpush.bf16.msra.mxu0 %v238
    %318 = vmatmul.bf16.gmra.mxu0 %v123
    %v319 = vpop.f32.mrf.mxu0
    %v320 = vadd.f32 0.0, %v319
    %v321 = vpop.f32.mrf.mxu0
    %322 = vdwg.mxu0
    %s323 = scalar_lea.vmem [#allocation5], 192
    %v324 = vld [vmem:[%s323] sm:$0xff]
    %v325 = vld [vmem:[%s323 + $0x8] sm:$0xf]
    %v326 = vld [vmem:[%s323 + $0xc] sm:$0xff]
    %v327 = vld [vmem:[%s323 + $0x14] sm:$0xf]
    %v328 = vld [vmem:[%s323 + $0x18] sm:$0xff]
    %v329 = vld [vmem:[%s323 + $0x20] sm:$0xf]
    %v330 = vld [vmem:[%s323 + $0x24] sm:$0xff]
    %v331 = vld [vmem:[%s323 + $0x2c] sm:$0xf]
    %v332 = vld [vmem:[%s323 + $0x30] sm:$0xff]
    %v333 = vld [vmem:[%s323 + $0x38] sm:$0xf]
    %v334 = vld [vmem:[%s323 + $0x3c] sm:$0xff]
    %v335 = vld [vmem:[%s323 + $0x44] sm:$0xf]
    %v336 = vld [vmem:[%s323 + $0x48] sm:$0xff]
    %v337 = vld [vmem:[%s323 + $0x50] sm:$0xf]
    %v338 = vld [vmem:[%s323 + $0x54] sm:$0xff]
    %v339 = vld [vmem:[%s323 + $0x5c] sm:$0xf]
    %v340 = vld [vmem:[%s323 + $0x60] sm:$0xff]
    %v341 = vld [vmem:[%s323 + $0x68] sm:$0xf]
    %v342 = vld [vmem:[%s323 + $0x6c] sm:$0xff]
    %v343 = vld [vmem:[%s323 + $0x74] sm:$0xf]
    %v344 = vld [vmem:[%s323 + $0x78] sm:$0xff]
    %v345 = vld [vmem:[%s323 + $0x80] sm:$0xf]
    %v346 = vld [vmem:[%s323 + $0x84] sm:$0xff]
    %v347 = vld [vmem:[%s323 + $0x8c] sm:$0xf]
    %v348 = vld [vmem:[%s323 + $0x90] sm:$0xff]
    %v349 = vld [vmem:[%s323 + $0x98] sm:$0xf]
    %v350 = vld [vmem:[%s323 + $0x9c] sm:$0xff]
    %v351 = vld [vmem:[%s323 + $0xa4] sm:$0xf]
    %v352 = vld [vmem:[%s323 + $0xa8] sm:$0xff]
    %v353 = vld [vmem:[%s323 + $0xb0] sm:$0xf]
    %v354 = vld [vmem:[%s323 + $0xb4] sm:$0xff]
    %v355 = vld [vmem:[%s323 + $0xbc] sm:$0xf]
    %v388 = vunpack.c.l.b16 %v324
    %v389 = vunpack.c.h.b16 %v324
    %v390 = vunpack.c.l.b16 %v325
    %v391 = vunpack.c.l.b16 %v326
    %v392 = vunpack.c.h.b16 %v326
    %v393 = vunpack.c.l.b16 %v327
    %v394 = vunpack.c.l.b16 %v328
    %v395 = vunpack.c.h.b16 %v328
    %v396 = vunpack.c.l.b16 %v329
    %v397 = vunpack.c.l.b16 %v330
    %v398 = vunpack.c.h.b16 %v330
    %v399 = vunpack.c.l.b16 %v331
    %v400 = vunpack.c.l.b16 %v332
    %v401 = vunpack.c.h.b16 %v332
    %v402 = vunpack.c.l.b16 %v333
    %v403 = vunpack.c.l.b16 %v334
    %v404 = vunpack.c.h.b16 %v334
    %v405 = vunpack.c.l.b16 %v335
    %v406 = vunpack.c.l.b16 %v336
    %v407 = vunpack.c.h.b16 %v336
    %v408 = vunpack.c.l.b16 %v337
    %v409 = vunpack.c.l.b16 %v338
    %v410 = vunpack.c.h.b16 %v338
    %v411 = vunpack.c.l.b16 %v339
    %v412 = vunpack.c.l.b16 %v340
    %v413 = vunpack.c.h.b16 %v340
    %v414 = vunpack.c.l.b16 %v341
    %v415 = vunpack.c.l.b16 %v342
    %v416 = vunpack.c.h.b16 %v342
    %v417 = vunpack.c.l.b16 %v343
    %v418 = vunpack.c.l.b16 %v344
    %v419 = vunpack.c.h.b16 %v344
    %v420 = vunpack.c.l.b16 %v345
    %v421 = vunpack.c.l.b16 %v346
    %v422 = vunpack.c.h.b16 %v346
    %v423 = vunpack.c.l.b16 %v347
    %v424 = vunpack.c.l.b16 %v348
    %v425 = vunpack.c.h.b16 %v348
    %v426 = vunpack.c.l.b16 %v349
    %v427 = vunpack.c.l.b16 %v350
    %v428 = vunpack.c.h.b16 %v350
    %v429 = vunpack.c.l.b16 %v351
    %v430 = vunpack.c.l.b16 %v352
    %v431 = vunpack.c.h.b16 %v352
    %v432 = vunpack.c.l.b16 %v353
    %v433 = vunpack.c.l.b16 %v354
    %v434 = vunpack.c.h.b16 %v354
    %v435 = vunpack.c.l.b16 %v355
    %v436 = vpack.c.b16 %v391, %v388
    %v437 = vpack.c.b16 %v392, %v389
    %v438 = vpack.c.b16 %v393, %v390
    %v439 = vpack.c.b16 %v397, %v394
    %v440 = vpack.c.b16 %v398, %v395
    %v441 = vpack.c.b16 %v399, %v396
    %v442 = vpack.c.b16 %v403, %v400
    %v443 = vpack.c.b16 %v404, %v401
    %v444 = vpack.c.b16 %v405, %v402
    %v445 = vpack.c.b16 %v409, %v406
    %v446 = vpack.c.b16 %v410, %v407
    %v447 = vpack.c.b16 %v411, %v408
    %v448 = vpack.c.b16 %v415, %v412
    %v449 = vpack.c.b16 %v416, %v413
    %v450 = vpack.c.b16 %v417, %v414
    %v451 = vpack.c.b16 %v421, %v418
    %v452 = vpack.c.b16 %v422, %v419
    %v453 = vpack.c.b16 %v423, %v420
    %v454 = vpack.c.b16 %v427, %v424
    %v455 = vpack.c.b16 %v428, %v425
    %v456 = vpack.c.b16 %v429, %v426
    %v457 = vpack.c.b16 %v433, %v430
    %v458 = vpack.c.b16 %v434, %v431
    %v459 = vpack.c.b16 %v435, %v432
    %484 = vmatpush.bf16.msra.mxu0 %v457
    %485 = vmatpush.bf16.msra.mxu0 %v454
    %486 = vmatpush.bf16.msra.mxu0 %v451
    %487 = vmatpush.bf16.msra.mxu0 %v448
    %488 = vmatpush.bf16.msra.mxu0 %v445
    %489 = vmatpush.bf16.msra.mxu0 %v442
    %490 = vmatpush.bf16.msra.mxu0 %v439
    %491 = vmatpush.bf16.msra.mxu0 %v436
    %492 = vmatmul.bf16.gmra.mxu0 %v123
    %v493 = vpop.f32.mrf.mxu0
    %v494 = vadd.f32 0.0, %v493
    %v495 = vpop.f32.mrf.mxu0
    %496 = vdwg.mxu0
    %497 = vmatpush.bf16.msra.mxu0 %v458
    %498 = vmatpush.bf16.msra.mxu0 %v455
    %499 = vmatpush.bf16.msra.mxu0 %v452
    %500 = vmatpush.bf16.msra.mxu0 %v449
    %501 = vmatpush.bf16.msra.mxu0 %v446
    %502 = vmatpush.bf16.msra.mxu0 %v443
    %503 = vmatpush.bf16.msra.mxu0 %v440
    %504 = vmatpush.bf16.msra.mxu0 %v437
    %505 = vmatmul.bf16.gmra.mxu0 %v123
    %v506 = vpop.f32.mrf.mxu0
    %v507 = vadd.f32 0.0, %v506
    %v508 = vpop.f32.mrf.mxu0
    %509 = vdwg.mxu0
    %510 = vmatpush.bf16.msra.mxu0 %v459
    %511 = vmatpush.bf16.msra.mxu0 %v456
    %512 = vmatpush.bf16.msra.mxu0 %v453
    %513 = vmatpush.bf16.msra.mxu0 %v450
    %514 = vmatpush.bf16.msra.mxu0 %v447
    %515 = vmatpush.bf16.msra.mxu0 %v444
    %516 = vmatpush.bf16.msra.mxu0 %v441
    %517 = vmatpush.bf16.msra.mxu0 %v438
    %518 = vmatmul.bf16.gmra.mxu0 %v123
    %v519 = vpop.f32.mrf.mxu0
    %v520 = vadd.f32 0.0, %v519
    %v521 = vpop.f32.mrf.mxu0
    %522 = vdwg.mxu0
    %v523 = vmax.f32 %v294, %v494
    %v524 = vmax.f32 %v307, %v507
    %v525 = vmax.f32 %v320, %v520
    %s526 = scalar_lea.vmem [#allocation5], 384
    %v527 = vld [vmem:[%s526] sm:$0xff]
    %v528 = vld [vmem:[%s526 + $0x8] sm:$0xf]
    %v529 = vld [vmem:[%s526 + $0xc] sm:$0xff]
    %v530 = vld [vmem:[%s526 + $0x14] sm:$0xf]
    %v531 = vld [vmem:[%s526 + $0x18] sm:$0xff]
    %v532 = vld [vmem:[%s526 + $0x20] sm:$0xf]
    %v533 = vld [vmem:[%s526 + $0x24] sm:$0xff]
    %v534 = vld [vmem:[%s526 + $0x2c] sm:$0xf]
    %v535 = vld [vmem:[%s526 + $0x30] sm:$0xff]
    %v536 = vld [vmem:[%s526 + $0x38] sm:$0xf]
    %v537 = vld [vmem:[%s526 + $0x3c] sm:$0xff]
    %v538 = vld [vmem:[%s526 + $0x44] sm:$0xf]
    %v539 = vld [vmem:[%s526 + $0x48] sm:$0xff]
    %v540 = vld [vmem:[%s526 + $0x50] sm:$0xf]
    %v541 = vld [vmem:[%s526 + $0x54] sm:$0xff]
    %v542 = vld [vmem:[%s526 + $0x5c] sm:$0xf]
    %v543 = vld [vmem:[%s526 + $0x60] sm:$0xff]
    %v544 = vld [vmem:[%s526 + $0x68] sm:$0xf]
    %v545 = vld [vmem:[%s526 + $0x6c] sm:$0xff]
    %v546 = vld [vmem:[%s526 + $0x74] sm:$0xf]
    %v547 = vld [vmem:[%s526 + $0x78] sm:$0xff]
    %v548 = vld [vmem:[%s526 + $0x80] sm:$0xf]
    %v549 = vld [vmem:[%s526 + $0x84] sm:$0xff]
    %v550 = vld [vmem:[%s526 + $0x8c] sm:$0xf]
    %v551 = vld [vmem:[%s526 + $0x90] sm:$0xff]
    %v552 = vld [vmem:[%s526 + $0x98] sm:$0xf]
    %v553 = vld [vmem:[%s526 + $0x9c] sm:$0xff]
    %v554 = vld [vmem:[%s526 + $0xa4] sm:$0xf]
    %v555 = vld [vmem:[%s526 + $0xa8] sm:$0xff]
    %v556 = vld [vmem:[%s526 + $0xb0] sm:$0xf]
    %v557 = vld [vmem:[%s526 + $0xb4] sm:$0xff]
    %v558 = vld [vmem:[%s526 + $0xbc] sm:$0xf]
    %v591 = vunpack.c.l.b16 %v527
    %v592 = vunpack.c.h.b16 %v527
    %v593 = vunpack.c.l.b16 %v528
    %v594 = vunpack.c.l.b16 %v529
    %v595 = vunpack.c.h.b16 %v529
    %v596 = vunpack.c.l.b16 %v530
    %v597 = vunpack.c.l.b16 %v531
    %v598 = vunpack.c.h.b16 %v531
    %v599 = vunpack.c.l.b16 %v532
    %v600 = vunpack.c.l.b16 %v533
    %v601 = vunpack.c.h.b16 %v533
    %v602 = vunpack.c.l.b16 %v534
    %v603 = vunpack.c.l.b16 %v535
    %v604 = vunpack.c.h.b16 %v535
    %v605 = vunpack.c.l.b16 %v536
    %v606 = vunpack.c.l.b16 %v537
    %v607 = vunpack.c.h.b16 %v537
    %v608 = vunpack.c.l.b16 %v538
    %v609 = vunpack.c.l.b16 %v539
    %v610 = vunpack.c.h.b16 %v539
    %v611 = vunpack.c.l.b16 %v540
    %v612 = vunpack.c.l.b16 %v541
    %v613 = vunpack.c.h.b16 %v541
    %v614 = vunpack.c.l.b16 %v542
    %v615 = vunpack.c.l.b16 %v543
    %v616 = vunpack.c.h.b16 %v543
    %v617 = vunpack.c.l.b16 %v544
    %v618 = vunpack.c.l.b16 %v545
    %v619 = vunpack.c.h.b16 %v545
    %v620 = vunpack.c.l.b16 %v546
    %v621 = vunpack.c.l.b16 %v547
    %v622 = vunpack.c.h.b16 %v547
    %v623 = vunpack.c.l.b16 %v548
    %v624 = vunpack.c.l.b16 %v549
    %v625 = vunpack.c.h.b16 %v549
    %v626 = vunpack.c.l.b16 %v550
    %v627 = vunpack.c.l.b16 %v551
    %v628 = vunpack.c.h.b16 %v551
    %v629 = vunpack.c.l.b16 %v552
    %v630 = vunpack.c.l.b16 %v553
    %v631 = vunpack.c.h.b16 %v553
    %v632 = vunpack.c.l.b16 %v554
    %v633 = vunpack.c.l.b16 %v555
    %v634 = vunpack.c.h.b16 %v555
    %v635 = vunpack.c.l.b16 %v556
    %v636 = vunpack.c.l.b16 %v557
    %v637 = vunpack.c.h.b16 %v557
    %v638 = vunpack.c.l.b16 %v558
    %v639 = vpack.c.b16 %v594, %v591
    %v640 = vpack.c.b16 %v595, %v592
    %v641 = vpack.c.b16 %v596, %v593
    %v642 = vpack.c.b16 %v600, %v597
    %v643 = vpack.c.b16 %v601, %v598
    %v644 = vpack.c.b16 %v602, %v599
    %v645 = vpack.c.b16 %v606, %v603
    %v646 = vpack.c.b16 %v607, %v604
    %v647 = vpack.c.b16 %v608, %v605
    %v648 = vpack.c.b16 %v612, %v609
    %v649 = vpack.c.b16 %v613, %v610
    %v650 = vpack.c.b16 %v614, %v611
    %v651 = vpack.c.b16 %v618, %v615
    %v652 = vpack.c.b16 %v619, %v616
    %v653 = vpack.c.b16 %v620, %v617
    %v654 = vpack.c.b16 %v624, %v621
    %v655 = vpack.c.b16 %v625, %v622
    %v656 = vpack.c.b16 %v626, %v623
    %v657 = vpack.c.b16 %v630, %v627
    %v658 = vpack.c.b16 %v631, %v628
    %v659 = vpack.c.b16 %v632, %v629
    %v660 = vpack.c.b16 %v636, %v633
    %v661 = vpack.c.b16 %v637, %v634
    %v662 = vpack.c.b16 %v638, %v635
    %687 = vmatpush.bf16.msra.mxu0 %v660
    %688 = vmatpush.bf16.msra.mxu0 %v657
    %689 = vmatpush.bf16.msra.mxu0 %v654
    %690 = vmatpush.bf16.msra.mxu0 %v651
    %691 = vmatpush.bf16.msra.mxu0 %v648
    %692 = vmatpush.bf16.msra.mxu0 %v645
    %693 = vmatpush.bf16.msra.mxu0 %v642
    %694 = vmatpush.bf16.msra.mxu0 %v639
    %695 = vmatmul.bf16.gmra.mxu0 %v123
    %v696 = vpop.f32.mrf.mxu0
    %v697 = vadd.f32 0.0, %v696
    %v698 = vpop.f32.mrf.mxu0
    %699 = vdwg.mxu0
    %700 = vmatpush.bf16.msra.mxu0 %v661
    %701 = vmatpush.bf16.msra.mxu0 %v658
    %702 = vmatpush.bf16.msra.mxu0 %v655
    %703 = vmatpush.bf16.msra.mxu0 %v652
    %704 = vmatpush.bf16.msra.mxu0 %v649
    %705 = vmatpush.bf16.msra.mxu0 %v646
    %706 = vmatpush.bf16.msra.mxu0 %v643
    %707 = vmatpush.bf16.msra.mxu0 %v640
    %708 = vmatmul.bf16.gmra.mxu0 %v123
    %v709 = vpop.f32.mrf.mxu0
    %v710 = vadd.f32 0.0, %v709
    %v711 = vpop.f32.mrf.mxu0
    %712 = vdwg.mxu0
    %713 = vmatpush.bf16.msra.mxu0 %v662
    %714 = vmatpush.bf16.msra.mxu0 %v659
    %715 = vmatpush.bf16.msra.mxu0 %v656
    %716 = vmatpush.bf16.msra.mxu0 %v653
    %717 = vmatpush.bf16.msra.mxu0 %v650
    %718 = vmatpush.bf16.msra.mxu0 %v647
    %719 = vmatpush.bf16.msra.mxu0 %v644
    %720 = vmatpush.bf16.msra.mxu0 %v641
    %721 = vmatmul.bf16.gmra.mxu0 %v123
    %v722 = vpop.f32.mrf.mxu0
    %v723 = vadd.f32 0.0, %v722
    %v724 = vpop.f32.mrf.mxu0
    %725 = vdwg.mxu0
    %v726 = vmax.f32 %v523, %v697
    %v727 = vmax.f32 %v524, %v710
    %v728 = vmax.f32 %v525, %v723
    %s729 = scalar_lea.vmem [#allocation5], 576
    %v730 = vld [vmem:[%s729] sm:$0xff]
    %v731 = vld [vmem:[%s729 + $0x8] sm:$0xf]
    %v732 = vld [vmem:[%s729 + $0xc] sm:$0xff]
    %v733 = vld [vmem:[%s729 + $0x14] sm:$0xf]
    %v734 = vld [vmem:[%s729 + $0x18] sm:$0xff]
    %v735 = vld [vmem:[%s729 + $0x20] sm:$0xf]
    %v736 = vld [vmem:[%s729 + $0x24] sm:$0xff]
    %v737 = vld [vmem:[%s729 + $0x2c] sm:$0xf]
    %v738 = vld [vmem:[%s729 + $0x30] sm:$0xff]
    %v739 = vld [vmem:[%s729 + $0x38] sm:$0xf]
    %v740 = vld [vmem:[%s729 + $0x3c] sm:$0xff]
    %v741 = vld [vmem:[%s729 + $0x44] sm:$0xf]
    %v742 = vld [vmem:[%s729 + $0x48] sm:$0xff]
    %v743 = vld [vmem:[%s729 + $0x50] sm:$0xf]
    %v744 = vld [vmem:[%s729 + $0x54] sm:$0xff]
    %v745 = vld [vmem:[%s729 + $0x5c] sm:$0xf]
    %v746 = vld [vmem:[%s729 + $0x60] sm:$0xff]
    %v747 = vld [vmem:[%s729 + $0x68] sm:$0xf]
    %v748 = vld [vmem:[%s729 + $0x6c] sm:$0xff]
    %v749 = vld [vmem:[%s729 + $0x74] sm:$0xf]
    %v750 = vld [vmem:[%s729 + $0x78] sm:$0xff]
    %v751 = vld [vmem:[%s729 + $0x80] sm:$0xf]
    %v752 = vld [vmem:[%s729 + $0x84] sm:$0xff]
    %v753 = vld [vmem:[%s729 + $0x8c] sm:$0xf]
    %v754 = vld [vmem:[%s729 + $0x90] sm:$0xff]
    %v755 = vld [vmem:[%s729 + $0x98] sm:$0xf]
    %v756 = vld [vmem:[%s729 + $0x9c] sm:$0xff]
    %v757 = vld [vmem:[%s729 + $0xa4] sm:$0xf]
    %v758 = vld [vmem:[%s729 + $0xa8] sm:$0xff]
    %v759 = vld [vmem:[%s729 + $0xb0] sm:$0xf]
    %v760 = vld [vmem:[%s729 + $0xb4] sm:$0xff]
    %v761 = vld [vmem:[%s729 + $0xbc] sm:$0xf]
    %v794 = vunpack.c.l.b16 %v730
    %v795 = vunpack.c.h.b16 %v730
    %v796 = vunpack.c.l.b16 %v731
    %v797 = vunpack.c.l.b16 %v732
    %v798 = vunpack.c.h.b16 %v732
    %v799 = vunpack.c.l.b16 %v733
    %v800 = vunpack.c.l.b16 %v734
    %v801 = vunpack.c.h.b16 %v734
    %v802 = vunpack.c.l.b16 %v735
    %v803 = vunpack.c.l.b16 %v736
    %v804 = vunpack.c.h.b16 %v736
    %v805 = vunpack.c.l.b16 %v737
    %v806 = vunpack.c.l.b16 %v738
    %v807 = vunpack.c.h.b16 %v738
    %v808 = vunpack.c.l.b16 %v739
    %v809 = vunpack.c.l.b16 %v740
    %v810 = vunpack.c.h.b16 %v740
    %v811 = vunpack.c.l.b16 %v741
    %v812 = vunpack.c.l.b16 %v742
    %v813 = vunpack.c.h.b16 %v742
    %v814 = vunpack.c.l.b16 %v743
    %v815 = vunpack.c.l.b16 %v744
    %v816 = vunpack.c.h.b16 %v744
    %v817 = vunpack.c.l.b16 %v745
    %v818 = vunpack.c.l.b16 %v746
    %v819 = vunpack.c.h.b16 %v746
    %v820 = vunpack.c.l.b16 %v747
    %v821 = vunpack.c.l.b16 %v748
    %v822 = vunpack.c.h.b16 %v748
    %v823 = vunpack.c.l.b16 %v749
    %v824 = vunpack.c.l.b16 %v750
    %v825 = vunpack.c.h.b16 %v750
    %v826 = vunpack.c.l.b16 %v751
    %v827 = vunpack.c.l.b16 %v752
    %v828 = vunpack.c.h.b16 %v752
    %v829 = vunpack.c.l.b16 %v753
    %v830 = vunpack.c.l.b16 %v754
    %v831 = vunpack.c.h.b16 %v754
    %v832 = vunpack.c.l.b16 %v755
    %v833 = vunpack.c.l.b16 %v756
    %v834 = vunpack.c.h.b16 %v756
    %v835 = vunpack.c.l.b16 %v757
    %v836 = vunpack.c.l.b16 %v758
    %v837 = vunpack.c.h.b16 %v758
    %v838 = vunpack.c.l.b16 %v759
    %v839 = vunpack.c.l.b16 %v760
    %v840 = vunpack.c.h.b16 %v760
    %v841 = vunpack.c.l.b16 %v761
    %v842 = vpack.c.b16 %v797, %v794
    %v843 = vpack.c.b16 %v798, %v795
    %v844 = vpack.c.b16 %v799, %v796
    %v845 = vpack.c.b16 %v803, %v800
    %v846 = vpack.c.b16 %v804, %v801
    %v847 = vpack.c.b16 %v805, %v802
    %v848 = vpack.c.b16 %v809, %v806
    %v849 = vpack.c.b16 %v810, %v807
    %v850 = vpack.c.b16 %v811, %v808
    %v851 = vpack.c.b16 %v815, %v812
    %v852 = vpack.c.b16 %v816, %v813
    %v853 = vpack.c.b16 %v817, %v814
    %v854 = vpack.c.b16 %v821, %v818
    %v855 = vpack.c.b16 %v822, %v819
    %v856 = vpack.c.b16 %v823, %v820
    %v857 = vpack.c.b16 %v827, %v824
    %v858 = vpack.c.b16 %v828, %v825
    %v859 = vpack.c.b16 %v829, %v826
    %v860 = vpack.c.b16 %v833, %v830
    %v861 = vpack.c.b16 %v834, %v831
    %v862 = vpack.c.b16 %v835, %v832
    %v863 = vpack.c.b16 %v839, %v836
    %v864 = vpack.c.b16 %v840, %v837
    %v865 = vpack.c.b16 %v841, %v838
    %890 = vmatpush.bf16.msra.mxu0 %v863
    %891 = vmatpush.bf16.msra.mxu0 %v860
    %892 = vmatpush.bf16.msra.mxu0 %v857
    %893 = vmatpush.bf16.msra.mxu0 %v854
    %894 = vmatpush.bf16.msra.mxu0 %v851
    %895 = vmatpush.bf16.msra.mxu0 %v848
    %896 = vmatpush.bf16.msra.mxu0 %v845
    %897 = vmatpush.bf16.msra.mxu0 %v842
    %898 = vmatmul.bf16.gmra.mxu0 %v123
    %v899 = vpop.f32.mrf.mxu0
    %v900 = vadd.f32 0.0, %v899
    %v901 = vpop.f32.mrf.mxu0
    %902 = vdwg.mxu0
    %903 = vmatpush.bf16.msra.mxu0 %v864
    %904 = vmatpush.bf16.msra.mxu0 %v861
    %905 = vmatpush.bf16.msra.mxu0 %v858
    %906 = vmatpush.bf16.msra.mxu0 %v855
    %907 = vmatpush.bf16.msra.mxu0 %v852
    %908 = vmatpush.bf16.msra.mxu0 %v849
    %909 = vmatpush.bf16.msra.mxu0 %v846
    %910 = vmatpush.bf16.msra.mxu0 %v843
    %911 = vmatmul.bf16.gmra.mxu0 %v123
    %v912 = vpop.f32.mrf.mxu0
    %v913 = vadd.f32 0.0, %v912
    %v914 = vpop.f32.mrf.mxu0
    %915 = vdwg.mxu0
    %916 = vmatpush.bf16.msra.mxu0 %v865
    %917 = vmatpush.bf16.msra.mxu0 %v862
    %918 = vmatpush.bf16.msra.mxu0 %v859
    %919 = vmatpush.bf16.msra.mxu0 %v856
    %920 = vmatpush.bf16.msra.mxu0 %v853
    %921 = vmatpush.bf16.msra.mxu0 %v850
    %922 = vmatpush.bf16.msra.mxu0 %v847
    %923 = vmatpush.bf16.msra.mxu0 %v844
    %924 = vmatmul.bf16.gmra.mxu0 %v123
    %v925 = vpop.f32.mrf.mxu0
    %v926 = vadd.f32 0.0, %v925
    %v927 = vpop.f32.mrf.mxu0
    %928 = vdwg.mxu0
    %v929 = vmax.f32 %v726, %v900
    %v930 = vmax.f32 %v727, %v913
    %v931 = vmax.f32 %v728, %v926
    %v932 = vld [vmem:[#allocation7] sm:$0x7]
    %v934 = vperm.slane %v932, 0
    %v935 = vperm.slane %v932, 1
    %v936 = vperm.slane %v932, 2
    %v940 = vadd.f32 %v929, %v934
    %v941 = vadd.f32 %v930, %v935
    %v942 = vadd.f32 %v931, %v936
    %v943 = vmax.f32 %v940, 0.0
    %v944 = vmax.f32 %v941, 0.0
    %v945 = vmax.f32 %v942, 0.0
    %v946 = vpack.c.bf16 %v943, %v943
    %v947 = vpack.c.bf16 %v944, %v944
    %v948 = vpack.c.bf16 %v945, %v945
    %v949 = vld [vmem:[#allocation8] sm:$0xff]
    %v950 = vld [vmem:[#allocation8 + $0x8] sm:$0xff]
    %v951 = vld [vmem:[#allocation8 + $0x10] sm:$0xff]
    %v952 = vld [vmem:[#allocation8 + $0x18] sm:$0xff]
    %v953 = vld [vmem:[#allocation8 + $0x20] sm:$0xff]
    %v954 = vld [vmem:[#allocation8 + $0x28] sm:$0xff]
    %v955 = vld [vmem:[#allocation8 + $0x30] sm:$0xff]
    %v956 = vld [vmem:[#allocation8 + $0x38] sm:$0xff]
    %v957 = vld [vmem:[#allocation8 + $0x40] sm:$0xff]
    %v958 = vld [vmem:[#allocation8 + $0x48] sm:$0xff]
    %v959 = vld [vmem:[#allocation8 + $0x50] sm:$0xff]
    %v960 = vld [vmem:[#allocation8 + $0x58] sm:$0xff]
    %v961 = vld [vmem:[#allocation8 + $0x60] sm:$0xff]
    %v962 = vld [vmem:[#allocation8 + $0x68] sm:$0xff]
    %v963 = vld [vmem:[#allocation8 + $0x70] sm:$0xff]
    %v964 = vld [vmem:[#allocation8 + $0x78] sm:$0xff]
    %v965 = vld [vmem:[#allocation8 + $0x80] sm:$0xff]
    %v966 = vld [vmem:[#allocation8 + $0x88] sm:$0xff]
    %v967 = vld [vmem:[#allocation8 + $0x90] sm:$0xff]
    %v968 = vld [vmem:[#allocation8 + $0x98] sm:$0xff]
    %v969 = vld [vmem:[#allocation8 + $0xa0] sm:$0xff]
    %v970 = vld [vmem:[#allocation8 + $0xa8] sm:$0xff]
    %v971 = vld [vmem:[#allocation8 + $0xb0] sm:$0xff]
    %v972 = vld [vmem:[#allocation8 + $0xb8] sm:$0xff]
    %v973 = vld [vmem:[#allocation8 + $0xc0] sm:$0xff]
    %v974 = vld [vmem:[#allocation8 + $0xc8] sm:$0xff]
    %v975 = vld [vmem:[#allocation8 + $0xd0] sm:$0xff]
    %v976 = vld [vmem:[#allocation8 + $0xd8] sm:$0xff]
    %v977 = vld [vmem:[#allocation8 + $0xe0] sm:$0xff]
    %v978 = vld [vmem:[#allocation8 + $0xe8] sm:$0xff]
    %v979 = vld [vmem:[#allocation8 + $0xf0] sm:$0xff]
    %v980 = vld [vmem:[#allocation8 + $0xf8] sm:$0xff]
    %v981 = vld [vmem:[#allocation8 + $0x100] sm:$0xff]
    %v982 = vld [vmem:[#allocation8 + $0x108] sm:$0xff]
    %v983 = vld [vmem:[#allocation8 + $0x110] sm:$0xff]
    %v984 = vld [vmem:[#allocation8 + $0x118] sm:$0xff]
    %v985 = vld [vmem:[#allocation8 + $0x120] sm:$0xff]
    %v986 = vld [vmem:[#allocation8 + $0x128] sm:$0xff]
    %v987 = vld [vmem:[#allocation8 + $0x130] sm:$0xff]
    %v988 = vld [vmem:[#allocation8 + $0x138] sm:$0xff]
    %v989 = vld [vmem:[#allocation8 + $0x140] sm:$0xff]
    %v990 = vld [vmem:[#allocation8 + $0x148] sm:$0xff]
    %v991 = vld [vmem:[#allocation8 + $0x150] sm:$0xff]
    %v992 = vld [vmem:[#allocation8 + $0x158] sm:$0xff]
    %v993 = vld [vmem:[#allocation8 + $0x160] sm:$0xff]
    %v994 = vld [vmem:[#allocation8 + $0x168] sm:$0xff]
    %v995 = vld [vmem:[#allocation8 + $0x170] sm:$0xff]
    %v996 = vld [vmem:[#allocation8 + $0x178] sm:$0xff]
    %v997 = vld [vmem:[%s4] sm:$0x3]
    %v999 = vperm.slane %v997, 0
    %v1000 = vperm.slane %v997, 1
    %v1051 = vunpack.c.l.b16 %v949
    %v1052 = vunpack.c.h.b16 %v949
    %v1053 = vunpack.c.l.b16 %v950
    %v1054 = vunpack.c.h.b16 %v950
    %v1055 = vunpack.c.l.b16 %v951
    %v1056 = vunpack.c.h.b16 %v951
    %v1057 = vunpack.c.l.b16 %v952
    %v1058 = vunpack.c.h.b16 %v952
    %v1059 = vunpack.c.l.b16 %v953
    %v1060 = vunpack.c.h.b16 %v953
    %v1061 = vunpack.c.l.b16 %v954
    %v1062 = vunpack.c.h.b16 %v954
    %v1063 = vunpack.c.l.b16 %v955
    %v1064 = vunpack.c.h.b16 %v955
    %v1065 = vunpack.c.l.b16 %v956
    %v1066 = vunpack.c.h.b16 %v956
    %v1067 = vunpack.c.l.b16 %v957
    %v1068 = vunpack.c.h.b16 %v957
    %v1069 = vunpack.c.l.b16 %v958
    %v1070 = vunpack.c.h.b16 %v958
    %v1071 = vunpack.c.l.b16 %v959
    %v1072 = vunpack.c.h.b16 %v959
    %v1073 = vunpack.c.l.b16 %v960
    %v1074 = vunpack.c.h.b16 %v960
    %v1075 = vunpack.c.l.b16 %v961
    %v1076 = vunpack.c.h.b16 %v961
    %v1077 = vunpack.c.l.b16 %v962
    %v1078 = vunpack.c.h.b16 %v962
    %v1079 = vunpack.c.l.b16 %v963
    %v1080 = vunpack.c.h.b16 %v963
    %v1081 = vunpack.c.l.b16 %v964
    %v1082 = vunpack.c.h.b16 %v964
    %v1083 = vunpack.c.l.b16 %v965
    %v1084 = vunpack.c.h.b16 %v965
    %v1085 = vunpack.c.l.b16 %v966
    %v1086 = vunpack.c.h.b16 %v966
    %v1087 = vunpack.c.l.b16 %v967
    %v1088 = vunpack.c.h.b16 %v967
    %v1089 = vunpack.c.l.b16 %v968
    %v1090 = vunpack.c.h.b16 %v968
    %v1091 = vunpack.c.l.b16 %v969
    %v1092 = vunpack.c.h.b16 %v969
    %v1093 = vunpack.c.l.b16 %v970
    %v1094 = vunpack.c.h.b16 %v970
    %v1095 = vunpack.c.l.b16 %v971
    %v1096 = vunpack.c.h.b16 %v971
    %v1097 = vunpack.c.l.b16 %v972
    %v1098 = vunpack.c.h.b16 %v972
    %v1099 = vunpack.c.l.b16 %v973
    %v1100 = vunpack.c.h.b16 %v973
    %v1101 = vunpack.c.l.b16 %v974
    %v1102 = vunpack.c.h.b16 %v974
    %v1103 = vunpack.c.l.b16 %v975
    %v1104 = vunpack.c.h.b16 %v975
    %v1105 = vunpack.c.l.b16 %v976
    %v1106 = vunpack.c.h.b16 %v976
    %v1107 = vunpack.c.l.b16 %v977
    %v1108 = vunpack.c.h.b16 %v977
    %v1109 = vunpack.c.l.b16 %v978
    %v1110 = vunpack.c.h.b16 %v978
    %v1111 = vunpack.c.l.b16 %v979
    %v1112 = vunpack.c.h.b16 %v979
    %v1113 = vunpack.c.l.b16 %v980
    %v1114 = vunpack.c.h.b16 %v980
    %v1115 = vunpack.c.l.b16 %v981
    %v1116 = vunpack.c.h.b16 %v981
    %v1117 = vunpack.c.l.b16 %v982
    %v1118 = vunpack.c.h.b16 %v982
    %v1119 = vunpack.c.l.b16 %v983
    %v1120 = vunpack.c.h.b16 %v983
    %v1121 = vunpack.c.l.b16 %v984
    %v1122 = vunpack.c.h.b16 %v984
    %v1123 = vunpack.c.l.b16 %v985
    %v1124 = vunpack.c.h.b16 %v985
    %v1125 = vunpack.c.l.b16 %v986
    %v1126 = vunpack.c.h.b16 %v986
    %v1127 = vunpack.c.l.b16 %v987
    %v1128 = vunpack.c.h.b16 %v987
    %v1129 = vunpack.c.l.b16 %v988
    %v1130 = vunpack.c.h.b16 %v988
    %v1131 = vunpack.c.l.b16 %v989
    %v1132 = vunpack.c.h.b16 %v989
    %v1133 = vunpack.c.l.b16 %v990
    %v1134 = vunpack.c.h.b16 %v990
    %v1135 = vunpack.c.l.b16 %v991
    %v1136 = vunpack.c.h.b16 %v991
    %v1137 = vunpack.c.l.b16 %v992
    %v1138 = vunpack.c.h.b16 %v992
    %v1139 = vunpack.c.l.b16 %v993
    %v1140 = vunpack.c.h.b16 %v993
    %v1141 = vunpack.c.l.b16 %v994
    %v1142 = vunpack.c.h.b16 %v994
    %v1143 = vunpack.c.l.b16 %v995
    %v1144 = vunpack.c.h.b16 %v995
    %v1145 = vunpack.c.l.b16 %v996
    %v1146 = vunpack.c.h.b16 %v996
    %v1147 = vpack.c.b16 %v1053, %v1051
    %v1148 = vpack.c.b16 %v1054, %v1052
    %v1149 = vpack.c.b16 %v1057, %v1055
    %v1150 = vpack.c.b16 %v1058, %v1056
    %v1151 = vpack.c.b16 %v1061, %v1059
    %v1152 = vpack.c.b16 %v1062, %v1060
    %v1153 = vpack.c.b16 %v1065, %v1063
    %v1154 = vpack.c.b16 %v1066, %v1064
    %v1155 = vpack.c.b16 %v1069, %v1067
    %v1156 = vpack.c.b16 %v1070, %v1068
    %v1157 = vpack.c.b16 %v1073, %v1071
    %v1158 = vpack.c.b16 %v1074, %v1072
    %v1159 = vpack.c.b16 %v1077, %v1075
    %v1160 = vpack.c.b16 %v1078, %v1076
    %v1161 = vpack.c.b16 %v1081, %v1079
    %v1162 = vpack.c.b16 %v1082, %v1080
    %v1163 = vpack.c.b16 %v1085, %v1083
    %v1164 = vpack.c.b16 %v1086, %v1084
    %v1165 = vpack.c.b16 %v1089, %v1087
    %v1166 = vpack.c.b16 %v1090, %v1088
    %v1167 = vpack.c.b16 %v1093, %v1091
    %v1168 = vpack.c.b16 %v1094, %v1092
    %v1169 = vpack.c.b16 %v1097, %v1095
    %v1170 = vpack.c.b16 %v1098, %v1096
    %v1171 = vpack.c.b16 %v1101, %v1099
    %v1172 = vpack.c.b16 %v1102, %v1100
    %v1173 = vpack.c.b16 %v1105, %v1103
    %v1174 = vpack.c.b16 %v1106, %v1104
    %v1175 = vpack.c.b16 %v1109, %v1107
    %v1176 = vpack.c.b16 %v1110, %v1108
    %v1177 = vpack.c.b16 %v1113, %v1111
    %v1178 = vpack.c.b16 %v1114, %v1112
    %v1179 = vpack.c.b16 %v1117, %v1115
    %v1180 = vpack.c.b16 %v1118, %v1116
    %v1181 = vpack.c.b16 %v1121, %v1119
    %v1182 = vpack.c.b16 %v1122, %v1120
    %v1183 = vpack.c.b16 %v1125, %v1123
    %v1184 = vpack.c.b16 %v1126, %v1124
    %v1185 = vpack.c.b16 %v1129, %v1127
    %v1186 = vpack.c.b16 %v1130, %v1128
    %v1187 = vpack.c.b16 %v1133, %v1131
    %v1188 = vpack.c.b16 %v1134, %v1132
    %v1189 = vpack.c.b16 %v1137, %v1135
    %v1190 = vpack.c.b16 %v1138, %v1136
    %v1191 = vpack.c.b16 %v1141, %v1139
    %v1192 = vpack.c.b16 %v1142, %v1140
    %v1193 = vpack.c.b16 %v1145, %v1143
    %v1194 = vpack.c.b16 %v1146, %v1144
    %1243 = vmatpush.bf16.msra.mxu0 %v1161
    %1244 = vmatpush.bf16.msra.mxu0 %v1159
    %1245 = vmatpush.bf16.msra.mxu0 %v1157
    %1246 = vmatpush.bf16.msra.mxu0 %v1155
    %1247 = vmatpush.bf16.msra.mxu0 %v1153
    %1248 = vmatpush.bf16.msra.mxu0 %v1151
    %1249 = vmatpush.bf16.msra.mxu0 %v1149
    %1250 = vmatpush.bf16.msra.mxu0 %v1147
    %1251 = vmatmul.bf16.gmra.mxu0 %v946
    %v1252 = vpop.f32.mrf.mxu0
    %v1253 = vadd.f32 %v999, %v1252
    %v1254 = vpop.f32.mrf.mxu0
    %1255 = vdwg.mxu0
    %1256 = vmatpush.bf16.msra.mxu0 %v1177
    %1257 = vmatpush.bf16.msra.mxu0 %v1175
    %1258 = vmatpush.bf16.msra.mxu0 %v1173
    %1259 = vmatpush.bf16.msra.mxu0 %v1171
    %1260 = vmatpush.bf16.msra.mxu0 %v1169
    %1261 = vmatpush.bf16.msra.mxu0 %v1167
    %1262 = vmatpush.bf16.msra.mxu0 %v1165
    %1263 = vmatpush.bf16.msra.mxu0 %v1163
    %1264 = vmatmul.bf16.gmra.mxu0 %v947
    %v1265 = vpop.f32.mrf.mxu0
    %v1266 = vadd.f32 %v1253, %v1265
    %v1267 = vpop.f32.mrf.mxu0
    %1268 = vdwg.mxu0
    %1269 = vmatpush.bf16.msra.mxu0 %v1193
    %1270 = vmatpush.bf16.msra.mxu0 %v1191
    %1271 = vmatpush.bf16.msra.mxu0 %v1189
    %1272 = vmatpush.bf16.msra.mxu0 %v1187
    %1273 = vmatpush.bf16.msra.mxu0 %v1185
    %1274 = vmatpush.bf16.msra.mxu0 %v1183
    %1275 = vmatpush.bf16.msra.mxu0 %v1181
    %1276 = vmatpush.bf16.msra.mxu0 %v1179
    %1277 = vmatmul.bf16.gmra.mxu0 %v948
    %v1278 = vpop.f32.mrf.mxu0
    %v1279 = vadd.f32 %v1266, %v1278
    %v1280 = vpop.f32.mrf.mxu0
    %1281 = vdwg.mxu0
    %1282 = vmatpush.bf16.msra.mxu0 %v1162
    %1283 = vmatpush.bf16.msra.mxu0 %v1160
    %1284 = vmatpush.bf16.msra.mxu0 %v1158
    %1285 = vmatpush.bf16.msra.mxu0 %v1156
    %1286 = vmatpush.bf16.msra.mxu0 %v1154
    %1287 = vmatpush.bf16.msra.mxu0 %v1152
    %1288 = vmatpush.bf16.msra.mxu0 %v1150
    %1289 = vmatpush.bf16.msra.mxu0 %v1148
    %1290 = vmatmul.bf16.gmra.mxu0 %v946
    %v1291 = vpop.f32.mrf.mxu0
    %v1292 = vadd.f32 %v1000, %v1291
    %v1293 = vpop.f32.mrf.mxu0
    %1294 = vdwg.mxu0
    %1295 = vmatpush.bf16.msra.mxu0 %v1178
    %1296 = vmatpush.bf16.msra.mxu0 %v1176
    %1297 = vmatpush.bf16.msra.mxu0 %v1174
    %1298 = vmatpush.bf16.msra.mxu0 %v1172
    %1299 = vmatpush.bf16.msra.mxu0 %v1170
    %1300 = vmatpush.bf16.msra.mxu0 %v1168
    %1301 = vmatpush.bf16.msra.mxu0 %v1166
    %1302 = vmatpush.bf16.msra.mxu0 %v1164
    %1303 = vmatmul.bf16.gmra.mxu0 %v947
    %v1304 = vpop.f32.mrf.mxu0
    %v1305 = vadd.f32 %v1292, %v1304
    %v1306 = vpop.f32.mrf.mxu0
    %1307 = vdwg.mxu0
    %1308 = vmatpush.bf16.msra.mxu0 %v1194
    %1309 = vmatpush.bf16.msra.mxu0 %v1192
    %1310 = vmatpush.bf16.msra.mxu0 %v1190
    %1311 = vmatpush.bf16.msra.mxu0 %v1188
    %1312 = vmatpush.bf16.msra.mxu0 %v1186
    %1313 = vmatpush.bf16.msra.mxu0 %v1184
    %1314 = vmatpush.bf16.msra.mxu0 %v1182
    %1315 = vmatpush.bf16.msra.mxu0 %v1180
    %1316 = vmatmul.bf16.gmra.mxu0 %v948
    %v1317 = vpop.f32.mrf.mxu0
    %v1318 = vadd.f32 %v1305, %v1317
    %v1319 = vpop.f32.mrf.mxu0
    %1320 = vdwg.mxu0
    %v1321 = vmax.f32 %v1279, 0.0
    %v1322 = vmax.f32 %v1318, 0.0
    %v1323 = vpack.c.bf16 %v1321, %v1321
    %v1324 = vpack.c.bf16 %v1322, %v1322
    %v1325 = vld [vmem:[#allocation10] sm:$0xff]
    %v1326 = vld [vmem:[#allocation10 + $0x8] sm:$0xff]
    %v1327 = vld [vmem:[#allocation10 + $0x10] sm:$0xff]
    %v1328 = vld [vmem:[#allocation10 + $0x18] sm:$0xff]
    %v1329 = vld [vmem:[#allocation10 + $0x20] sm:$0xff]
    %v1330 = vld [vmem:[#allocation10 + $0x28] sm:$0xff]
    %v1331 = vld [vmem:[#allocation10 + $0x30] sm:$0xff]
    %v1332 = vld [vmem:[#allocation10 + $0x38] sm:$0xff]
    %v1333 = vld [vmem:[#allocation10 + $0x40] sm:$0xff]
    %v1334 = vld [vmem:[#allocation10 + $0x48] sm:$0xff]
    %v1335 = vld [vmem:[#allocation10 + $0x50] sm:$0xff]
    %v1336 = vld [vmem:[#allocation10 + $0x58] sm:$0xff]
    %v1337 = vld [vmem:[#allocation10 + $0x60] sm:$0xff]
    %v1338 = vld [vmem:[#allocation10 + $0x68] sm:$0xff]
    %v1339 = vld [vmem:[#allocation10 + $0x70] sm:$0xff]
    %v1340 = vld [vmem:[#allocation10 + $0x78] sm:$0xff]
    %v1341 = vld [vmem:[#allocation10 + $0x80] sm:$0xff]
    %v1342 = vld [vmem:[#allocation10 + $0x88] sm:$0xff]
    %v1343 = vld [vmem:[#allocation10 + $0x90] sm:$0xff]
    %v1344 = vld [vmem:[#allocation10 + $0x98] sm:$0xff]
    %v1345 = vld [vmem:[#allocation10 + $0xa0] sm:$0xff]
    %v1346 = vld [vmem:[#allocation10 + $0xa8] sm:$0xff]
    %v1347 = vld [vmem:[#allocation10 + $0xb0] sm:$0xff]
    %v1348 = vld [vmem:[#allocation10 + $0xb8] sm:$0xff]
    %v1349 = vld [vmem:[#allocation10 + $0xc0] sm:$0xff]
    %v1350 = vld [vmem:[#allocation10 + $0xc8] sm:$0xff]
    %v1351 = vld [vmem:[#allocation10 + $0xd0] sm:$0xff]
    %v1352 = vld [vmem:[#allocation10 + $0xd8] sm:$0xff]
    %v1353 = vld [vmem:[#allocation10 + $0xe0] sm:$0xff]
    %v1354 = vld [vmem:[#allocation10 + $0xe8] sm:$0xff]
    %v1355 = vld [vmem:[#allocation10 + $0xf0] sm:$0xff]
    %v1356 = vld [vmem:[#allocation10 + $0xf8] sm:$0xff]
    %v1357 = vld [vmem:[%s6] sm:$0x3]
    %v1359 = vperm.slane %v1357, 0
    %v1360 = vperm.slane %v1357, 1
    %v1395 = vunpack.c.l.b16 %v1325
    %v1396 = vunpack.c.h.b16 %v1325
    %v1397 = vunpack.c.l.b16 %v1326
    %v1398 = vunpack.c.h.b16 %v1326
    %v1399 = vunpack.c.l.b16 %v1327
    %v1400 = vunpack.c.h.b16 %v1327
    %v1401 = vunpack.c.l.b16 %v1328
    %v1402 = vunpack.c.h.b16 %v1328
    %v1403 = vunpack.c.l.b16 %v1329
    %v1404 = vunpack.c.h.b16 %v1329
    %v1405 = vunpack.c.l.b16 %v1330
    %v1406 = vunpack.c.h.b16 %v1330
    %v1407 = vunpack.c.l.b16 %v1331
    %v1408 = vunpack.c.h.b16 %v1331
    %v1409 = vunpack.c.l.b16 %v1332
    %v1410 = vunpack.c.h.b16 %v1332
    %v1411 = vunpack.c.l.b16 %v1333
    %v1412 = vunpack.c.h.b16 %v1333
    %v1413 = vunpack.c.l.b16 %v1334
    %v1414 = vunpack.c.h.b16 %v1334
    %v1415 = vunpack.c.l.b16 %v1335
    %v1416 = vunpack.c.h.b16 %v1335
    %v1417 = vunpack.c.l.b16 %v1336
    %v1418 = vunpack.c.h.b16 %v1336
    %v1419 = vunpack.c.l.b16 %v1337
    %v1420 = vunpack.c.h.b16 %v1337
    %v1421 = vunpack.c.l.b16 %v1338
    %v1422 = vunpack.c.h.b16 %v1338
    %v1423 = vunpack.c.l.b16 %v1339
    %v1424 = vunpack.c.h.b16 %v1339
    %v1425 = vunpack.c.l.b16 %v1340
    %v1426 = vunpack.c.h.b16 %v1340
    %v1427 = vunpack.c.l.b16 %v1341
    %v1428 = vunpack.c.h.b16 %v1341
    %v1429 = vunpack.c.l.b16 %v1342
    %v1430 = vunpack.c.h.b16 %v1342
    %v1431 = vunpack.c.l.b16 %v1343
    %v1432 = vunpack.c.h.b16 %v1343
    %v1433 = vunpack.c.l.b16 %v1344
    %v1434 = vunpack.c.h.b16 %v1344
    %v1435 = vunpack.c.l.b16 %v1345
    %v1436 = vunpack.c.h.b16 %v1345
    %v1437 = vunpack.c.l.b16 %v1346
    %v1438 = vunpack.c.h.b16 %v1346
    %v1439 = vunpack.c.l.b16 %v1347
    %v1440 = vunpack.c.h.b16 %v1347
    %v1441 = vunpack.c.l.b16 %v1348
    %v1442 = vunpack.c.h.b16 %v1348
    %v1443 = vunpack.c.l.b16 %v1349
    %v1444 = vunpack.c.h.b16 %v1349
    %v1445 = vunpack.c.l.b16 %v1350
    %v1446 = vunpack.c.h.b16 %v1350
    %v1447 = vunpack.c.l.b16 %v1351
    %v1448 = vunpack.c.h.b16 %v1351
    %v1449 = vunpack.c.l.b16 %v1352
    %v1450 = vunpack.c.h.b16 %v1352
    %v1451 = vunpack.c.l.b16 %v1353
    %v1452 = vunpack.c.h.b16 %v1353
    %v1453 = vunpack.c.l.b16 %v1354
    %v1454 = vunpack.c.h.b16 %v1354
    %v1455 = vunpack.c.l.b16 %v1355
    %v1456 = vunpack.c.h.b16 %v1355
    %v1457 = vunpack.c.l.b16 %v1356
    %v1458 = vunpack.c.h.b16 %v1356
    %v1459 = vpack.c.b16 %v1397, %v1395
    %v1460 = vpack.c.b16 %v1398, %v1396
    %v1461 = vpack.c.b16 %v1401, %v1399
    %v1462 = vpack.c.b16 %v1402, %v1400
    %v1463 = vpack.c.b16 %v1405, %v1403
    %v1464 = vpack.c.b16 %v1406, %v1404
    %v1465 = vpack.c.b16 %v1409, %v1407
    %v1466 = vpack.c.b16 %v1410, %v1408
    %v1467 = vpack.c.b16 %v1413, %v1411
    %v1468 = vpack.c.b16 %v1414, %v1412
    %v1469 = vpack.c.b16 %v1417, %v1415
    %v1470 = vpack.c.b16 %v1418, %v1416
    %v1471 = vpack.c.b16 %v1421, %v1419
    %v1472 = vpack.c.b16 %v1422, %v1420
    %v1473 = vpack.c.b16 %v1425, %v1423
    %v1474 = vpack.c.b16 %v1426, %v1424
    %v1475 = vpack.c.b16 %v1429, %v1427
    %v1476 = vpack.c.b16 %v1430, %v1428
    %v1477 = vpack.c.b16 %v1433, %v1431
    %v1478 = vpack.c.b16 %v1434, %v1432
    %v1479 = vpack.c.b16 %v1437, %v1435
    %v1480 = vpack.c.b16 %v1438, %v1436
    %v1481 = vpack.c.b16 %v1441, %v1439
    %v1482 = vpack.c.b16 %v1442, %v1440
    %v1483 = vpack.c.b16 %v1445, %v1443
    %v1484 = vpack.c.b16 %v1446, %v1444
    %v1485 = vpack.c.b16 %v1449, %v1447
    %v1486 = vpack.c.b16 %v1450, %v1448
    %v1487 = vpack.c.b16 %v1453, %v1451
    %v1488 = vpack.c.b16 %v1454, %v1452
    %v1489 = vpack.c.b16 %v1457, %v1455
    %v1490 = vpack.c.b16 %v1458, %v1456
    %1523 = vmatpush.bf16.msra.mxu0 %v1473
    %1524 = vmatpush.bf16.msra.mxu0 %v1471
    %1525 = vmatpush.bf16.msra.mxu0 %v1469
    %1526 = vmatpush.bf16.msra.mxu0 %v1467
    %1527 = vmatpush.bf16.msra.mxu0 %v1465
    %1528 = vmatpush.bf16.msra.mxu0 %v1463
    %1529 = vmatpush.bf16.msra.mxu0 %v1461
    %1530 = vmatpush.bf16.msra.mxu0 %v1459
    %1531 = vmatmul.bf16.gmra.mxu0 %v1323
    %v1532 = vpop.f32.mrf.mxu0
    %v1533 = vadd.f32 %v1359, %v1532
    %v1534 = vpop.f32.mrf.mxu0
    %1535 = vdwg.mxu0
    %1536 = vmatpush.bf16.msra.mxu0 %v1489
    %1537 = vmatpush.bf16.msra.mxu0 %v1487
    %1538 = vmatpush.bf16.msra.mxu0 %v1485
    %1539 = vmatpush.bf16.msra.mxu0 %v1483
    %1540 = vmatpush.bf16.msra.mxu0 %v1481
    %1541 = vmatpush.bf16.msra.mxu0 %v1479
    %1542 = vmatpush.bf16.msra.mxu0 %v1477
    %1543 = vmatpush.bf16.msra.mxu0 %v1475
    %1544 = vmatmul.bf16.gmra.mxu0 %v1324
    %v1545 = vpop.f32.mrf.mxu0
    %v1546 = vadd.f32 %v1533, %v1545
    %v1547 = vpop.f32.mrf.mxu0
    %1548 = vdwg.mxu0
    %1549 = vmatpush.bf16.msra.mxu0 %v1474
    %1550 = vmatpush.bf16.msra.mxu0 %v1472
    %1551 = vmatpush.bf16.msra.mxu0 %v1470
    %1552 = vmatpush.bf16.msra.mxu0 %v1468
    %1553 = vmatpush.bf16.msra.mxu0 %v1466
    %1554 = vmatpush.bf16.msra.mxu0 %v1464
    %1555 = vmatpush.bf16.msra.mxu0 %v1462
    %1556 = vmatpush.bf16.msra.mxu0 %v1460
    %1557 = vmatmul.bf16.gmra.mxu0 %v1323
    %v1558 = vpop.f32.mrf.mxu0
    %v1559 = vadd.f32 %v1360, %v1558
    %v1560 = vpop.f32.mrf.mxu0
    %1561 = vdwg.mxu0
    %1562 = vmatpush.bf16.msra.mxu0 %v1490
    %1563 = vmatpush.bf16.msra.mxu0 %v1488
    %1564 = vmatpush.bf16.msra.mxu0 %v1486
    %1565 = vmatpush.bf16.msra.mxu0 %v1484
    %1566 = vmatpush.bf16.msra.mxu0 %v1482
    %1567 = vmatpush.bf16.msra.mxu0 %v1480
    %1568 = vmatpush.bf16.msra.mxu0 %v1478
    %1569 = vmatpush.bf16.msra.mxu0 %v1476
    %1570 = vmatmul.bf16.gmra.mxu0 %v1324
    %v1571 = vpop.f32.mrf.mxu0
    %v1572 = vadd.f32 %v1559, %v1571
    %v1573 = vpop.f32.mrf.mxu0
    %1574 = vdwg.mxu0
    %v1575 = vmax.f32 %v1546, 0.0
    %v1576 = vmax.f32 %v1572, 0.0
    %v1577 = vpack.c.bf16 %v1575, %v1575
    %v1578 = vpack.c.bf16 %v1576, %v1576
    %v1579 = vld [vmem:[#allocation11] sm:$0xff]
    %v1580 = vld [vmem:[#allocation11 + $0x8] sm:$0xff]
    %v1581 = vld [vmem:[#allocation11 + $0x10] sm:$0xff]
    %v1582 = vld [vmem:[#allocation11 + $0x18] sm:$0xff]
    %v1583 = vld [vmem:[#allocation11 + $0x20] sm:$0xff]
    %v1584 = vld [vmem:[#allocation11 + $0x28] sm:$0xff]
    %v1585 = vld [vmem:[#allocation11 + $0x30] sm:$0xff]
    %v1586 = vld [vmem:[#allocation11 + $0x38] sm:$0xff]
    %v1587 = vld [vmem:[#allocation11 + $0x40] sm:$0xff]
    %v1588 = vld [vmem:[#allocation11 + $0x48] sm:$0xff]
    %v1589 = vld [vmem:[#allocation11 + $0x50] sm:$0xff]
    %v1590 = vld [vmem:[#allocation11 + $0x58] sm:$0xff]
    %v1591 = vld [vmem:[#allocation11 + $0x60] sm:$0xff]
    %v1592 = vld [vmem:[#allocation11 + $0x68] sm:$0xff]
    %v1593 = vld [vmem:[#allocation11 + $0x70] sm:$0xff]
    %v1594 = vld [vmem:[#allocation11 + $0x78] sm:$0xff]
    %v1595 = vld [vmem:[#allocation11 + $0x80] sm:$0xff]
    %v1596 = vld [vmem:[#allocation11 + $0x88] sm:$0xff]
    %v1597 = vld [vmem:[#allocation11 + $0x90] sm:$0xff]
    %v1598 = vld [vmem:[#allocation11 + $0x98] sm:$0xff]
    %v1599 = vld [vmem:[#allocation11 + $0xa0] sm:$0xff]
    %v1600 = vld [vmem:[#allocation11 + $0xa8] sm:$0xff]
    %v1601 = vld [vmem:[#allocation11 + $0xb0] sm:$0xff]
    %v1602 = vld [vmem:[#allocation11 + $0xb8] sm:$0xff]
    %v1603 = vld [vmem:[#allocation11 + $0xc0] sm:$0xff]
    %v1604 = vld [vmem:[#allocation11 + $0xc8] sm:$0xff]
    %v1605 = vld [vmem:[#allocation11 + $0xd0] sm:$0xff]
    %v1606 = vld [vmem:[#allocation11 + $0xd8] sm:$0xff]
    %v1607 = vld [vmem:[#allocation11 + $0xe0] sm:$0xff]
    %v1608 = vld [vmem:[#allocation11 + $0xe8] sm:$0xff]
    %v1609 = vld [vmem:[#allocation11 + $0xf0] sm:$0xff]
    %v1610 = vld [vmem:[#allocation11 + $0xf8] sm:$0xff]
    %v1611 = vld [vmem:[%s8] sm:$0x3]
    %v1613 = vperm.slane %v1611, 0
    %v1614 = vperm.slane %v1611, 1
    %v1649 = vunpack.c.l.b16 %v1579
    %v1650 = vunpack.c.h.b16 %v1579
    %v1651 = vunpack.c.l.b16 %v1580
    %v1652 = vunpack.c.h.b16 %v1580
    %v1653 = vunpack.c.l.b16 %v1581
    %v1654 = vunpack.c.h.b16 %v1581
    %v1655 = vunpack.c.l.b16 %v1582
    %v1656 = vunpack.c.h.b16 %v1582
    %v1657 = vunpack.c.l.b16 %v1583
    %v1658 = vunpack.c.h.b16 %v1583
    %v1659 = vunpack.c.l.b16 %v1584
    %v1660 = vunpack.c.h.b16 %v1584
    %v1661 = vunpack.c.l.b16 %v1585
    %v1662 = vunpack.c.h.b16 %v1585
    %v1663 = vunpack.c.l.b16 %v1586
    %v1664 = vunpack.c.h.b16 %v1586
    %v1665 = vunpack.c.l.b16 %v1587
    %v1666 = vunpack.c.h.b16 %v1587
    %v1667 = vunpack.c.l.b16 %v1588
    %v1668 = vunpack.c.h.b16 %v1588
    %v1669 = vunpack.c.l.b16 %v1589
    %v1670 = vunpack.c.h.b16 %v1589
    %v1671 = vunpack.c.l.b16 %v1590
    %v1672 = vunpack.c.h.b16 %v1590
    %v1673 = vunpack.c.l.b16 %v1591
    %v1674 = vunpack.c.h.b16 %v1591
    %v1675 = vunpack.c.l.b16 %v1592
    %v1676 = vunpack.c.h.b16 %v1592
    %v1677 = vunpack.c.l.b16 %v1593
    %v1678 = vunpack.c.h.b16 %v1593
    %v1679 = vunpack.c.l.b16 %v1594
    %v1680 = vunpack.c.h.b16 %v1594
    %v1681 = vunpack.c.l.b16 %v1595
    %v1682 = vunpack.c.h.b16 %v1595
    %v1683 = vunpack.c.l.b16 %v1596
    %v1684 = vunpack.c.h.b16 %v1596
    %v1685 = vunpack.c.l.b16 %v1597
    %v1686 = vunpack.c.h.b16 %v1597
    %v1687 = vunpack.c.l.b16 %v1598
    %v1688 = vunpack.c.h.b16 %v1598
    %v1689 = vunpack.c.l.b16 %v1599
    %v1690 = vunpack.c.h.b16 %v1599
    %v1691 = vunpack.c.l.b16 %v1600
    %v1692 = vunpack.c.h.b16 %v1600
    %v1693 = vunpack.c.l.b16 %v1601
    %v1694 = vunpack.c.h.b16 %v1601
    %v1695 = vunpack.c.l.b16 %v1602
    %v1696 = vunpack.c.h.b16 %v1602
    %v1697 = vunpack.c.l.b16 %v1603
    %v1698 = vunpack.c.h.b16 %v1603
    %v1699 = vunpack.c.l.b16 %v1604
    %v1700 = vunpack.c.h.b16 %v1604
    %v1701 = vunpack.c.l.b16 %v1605
    %v1702 = vunpack.c.h.b16 %v1605
    %v1703 = vunpack.c.l.b16 %v1606
    %v1704 = vunpack.c.h.b16 %v1606
    %v1705 = vunpack.c.l.b16 %v1607
    %v1706 = vunpack.c.h.b16 %v1607
    %v1707 = vunpack.c.l.b16 %v1608
    %v1708 = vunpack.c.h.b16 %v1608
    %v1709 = vunpack.c.l.b16 %v1609
    %v1710 = vunpack.c.h.b16 %v1609
    %v1711 = vunpack.c.l.b16 %v1610
    %v1712 = vunpack.c.h.b16 %v1610
    %v1713 = vpack.c.b16 %v1651, %v1649
    %v1714 = vpack.c.b16 %v1652, %v1650
    %v1715 = vpack.c.b16 %v1655, %v1653
    %v1716 = vpack.c.b16 %v1656, %v1654
    %v1717 = vpack.c.b16 %v1659, %v1657
    %v1718 = vpack.c.b16 %v1660, %v1658
    %v1719 = vpack.c.b16 %v1663, %v1661
    %v1720 = vpack.c.b16 %v1664, %v1662
    %v1721 = vpack.c.b16 %v1667, %v1665
    %v1722 = vpack.c.b16 %v1668, %v1666
    %v1723 = vpack.c.b16 %v1671, %v1669
    %v1724 = vpack.c.b16 %v1672, %v1670
    %v1725 = vpack.c.b16 %v1675, %v1673
    %v1726 = vpack.c.b16 %v1676, %v1674
    %v1727 = vpack.c.b16 %v1679, %v1677
    %v1728 = vpack.c.b16 %v1680, %v1678
    %v1729 = vpack.c.b16 %v1683, %v1681
    %v1730 = vpack.c.b16 %v1684, %v1682
    %v1731 = vpack.c.b16 %v1687, %v1685
    %v1732 = vpack.c.b16 %v1688, %v1686
    %v1733 = vpack.c.b16 %v1691, %v1689
    %v1734 = vpack.c.b16 %v1692, %v1690
    %v1735 = vpack.c.b16 %v1695, %v1693
    %v1736 = vpack.c.b16 %v1696, %v1694
    %v1737 = vpack.c.b16 %v1699, %v1697
    %v1738 = vpack.c.b16 %v1700, %v1698
    %v1739 = vpack.c.b16 %v1703, %v1701
    %v1740 = vpack.c.b16 %v1704, %v1702
    %v1741 = vpack.c.b16 %v1707, %v1705
    %v1742 = vpack.c.b16 %v1708, %v1706
    %v1743 = vpack.c.b16 %v1711, %v1709
    %v1744 = vpack.c.b16 %v1712, %v1710
    %1777 = vmatpush.bf16.msra.mxu0 %v1727
    %1778 = vmatpush.bf16.msra.mxu0 %v1725
    %1779 = vmatpush.bf16.msra.mxu0 %v1723
    %1780 = vmatpush.bf16.msra.mxu0 %v1721
    %1781 = vmatpush.bf16.msra.mxu0 %v1719
    %1782 = vmatpush.bf16.msra.mxu0 %v1717
    %1783 = vmatpush.bf16.msra.mxu0 %v1715
    %1784 = vmatpush.bf16.msra.mxu0 %v1713
    %1785 = vmatmul.bf16.gmra.mxu0 %v1577
    %v1786 = vpop.f32.mrf.mxu0
    %v1787 = vadd.f32 %v1613, %v1786
    %v1788 = vpop.f32.mrf.mxu0
    %1789 = vdwg.mxu0
    %1790 = vmatpush.bf16.msra.mxu0 %v1743
    %1791 = vmatpush.bf16.msra.mxu0 %v1741
    %1792 = vmatpush.bf16.msra.mxu0 %v1739
    %1793 = vmatpush.bf16.msra.mxu0 %v1737
    %1794 = vmatpush.bf16.msra.mxu0 %v1735
    %1795 = vmatpush.bf16.msra.mxu0 %v1733
    %1796 = vmatpush.bf16.msra.mxu0 %v1731
    %1797 = vmatpush.bf16.msra.mxu0 %v1729
    %1798 = vmatmul.bf16.gmra.mxu0 %v1578
    %v1799 = vpop.f32.mrf.mxu0
    %v1800 = vadd.f32 %v1787, %v1799
    %v1801 = vpop.f32.mrf.mxu0
    %1802 = vdwg.mxu0
    %1803 = vmatpush.bf16.msra.mxu0 %v1728
    %1804 = vmatpush.bf16.msra.mxu0 %v1726
    %1805 = vmatpush.bf16.msra.mxu0 %v1724
    %1806 = vmatpush.bf16.msra.mxu0 %v1722
    %1807 = vmatpush.bf16.msra.mxu0 %v1720
    %1808 = vmatpush.bf16.msra.mxu0 %v1718
    %1809 = vmatpush.bf16.msra.mxu0 %v1716
    %1810 = vmatpush.bf16.msra.mxu0 %v1714
    %1811 = vmatmul.bf16.gmra.mxu0 %v1577
    %v1812 = vpop.f32.mrf.mxu0
    %v1813 = vadd.f32 %v1614, %v1812
    %v1814 = vpop.f32.mrf.mxu0
    %1815 = vdwg.mxu0
    %1816 = vmatpush.bf16.msra.mxu0 %v1744
    %1817 = vmatpush.bf16.msra.mxu0 %v1742
    %1818 = vmatpush.bf16.msra.mxu0 %v1740
    %1819 = vmatpush.bf16.msra.mxu0 %v1738
    %1820 = vmatpush.bf16.msra.mxu0 %v1736
    %1821 = vmatpush.bf16.msra.mxu0 %v1734
    %1822 = vmatpush.bf16.msra.mxu0 %v1732
    %1823 = vmatpush.bf16.msra.mxu0 %v1730
    %1824 = vmatmul.bf16.gmra.mxu0 %v1578
    %v1825 = vpop.f32.mrf.mxu0
    %v1826 = vadd.f32 %v1813, %v1825
    %v1827 = vpop.f32.mrf.mxu0
    %1828 = vdwg.mxu0
    %1829 = vst [vmem:[#allocation13] sm:$0xff] %v1800
    %1830 = vst [vmem:[#allocation13 + $0x8] sm:$0xff] %v1826
    // Predicated region
    $region62: #{tpu_custom_call.1} parent=1 // pred_check
      _
    $region63: #{tpu_custom_call.1} parent=1 // pred_check_branch
      %1832 = sbr.rel (0) target = $region65
    $region64: #{tpu_custom_call.1} parent=1 // pred_region
      %1834 = vsyncadd [#allocation4], 0
      %s1836 = sshll.u32 [#allocation13], 4
      %s1837 = int_to_ptr.vmem [resolvable:$true] %s1836
      %s1838 = sshll.u32 %s9, 4
      %s1839 = int_to_ptr.hbm [resolvable:$true] %s1838
      %1841 = dma.vmem_to_hbm [thread:$0]  %s1837, 256, %s1839, [#allocation4]
    $region65: #{tpu_custom_call.1} parent=1 // pred_fallthru
      _
    // Predicated region
    $region66: #{tpu_custom_call.1} parent=1 // pred_check
      _
    $region67: #{tpu_custom_call.1} parent=1 // pred_check_branch
      %1843 = sbr.rel (0) target = $region69
    $region68: #{tpu_custom_call.1} parent=1 // pred_region
      %1845 = dma.done [#allocation4], 256
    $region69: #{tpu_custom_call.1} parent=1 // pred_fallthru
      _
    %1846 = vsyncpa [#allocation3], 1
    %1847 = vsyncpa [#allocation6], 1
    %1848 = vsyncpa [#allocation9], 1
    %1849 = vsyncpa [#allocation12], 1
    %1850 = vsyncpa [#allocation4], 1

</llo_original>
